<compile_context>
chip_gen: v7x
topology: tpu7x:2x2x1
jax: 0.10.0
libtpu: 0.0.40
codegen_flags: <defaults>
</compile_context>

<pallas_src>
import functools

import jax
import jax.numpy as jnp
from jax.experimental import pallas as pl
from jax.experimental.pallas import tpu as pltpu


def _round_up(x, m):
    return ((x + m - 1) // m) * m


@functools.lru_cache(maxsize=None)
def _vmem_budget():
    cap = 64 * 1024 * 1024                      # conservative default (v7x per-TC)
    try:
        info = pltpu.get_tpu_info()
        cap = int(getattr(info, "vmem_capacity_bytes", cap))
    except Exception:
        pass
    # (per-tile working-set budget, explicit Mosaic scoped-VMEM limit)
    return cap // 4, (cap * 3) // 4


# ----------------------- with_conv=True: fused 3x3 / stride-2 conv -----------------------

def _conv_down_kernel(xa_ref, xb_ref, w01_ref, w2_ref, b_ref, o_ref, acc_ref):
    # xa : (1, TH, 2, WB, 2C)  row-pair tile (ph=0 even / ph=1 odd padded rows)
    # xb : (1, 1, 2, WB, 2C)   halo row-pair (only its even row feeds kh=2)
    # w01: (3, 2C, CpT)        [W[kh,0]; W[kh,1]] per kh   (column pair j)
    # w2 : (3,  C, CpT)        W[kh,2]            per kh   (even half of pair j+1)
    # b  : (1, CpT) f32        o: (1, TH*WB, CpT)          acc: (TH*WB, CpT) f32
    TH = xa_ref.shape[1]
    WB = xa_ref.shape[3]
    C2 = xa_ref.shape[4]
    C = C2 // 2
    M = TH * WB

    def taps(rows):                              # rows: (R, WB, 2C)
        m = rows.shape[0] * WB
        full = rows.reshape(m, C2)               # kw=0/1 taps of column pair j
        # kw=2 tap = even lanes of column pair j+1 -> one sublane roll (XLU),
        # wrap/cross-row leakage only lands in the padded (discarded) columns.
        ev = pltpu.roll(full[:, :C], m - 1, axis=0)
        return full, ev

    def fdot(a, b):
        return jnp.dot(a, b, preferred_element_type=jnp.float32)

    # kh = 0 (even row of each pair) -- initializes the accumulator (no zero-fill).
    full0, ev0 = taps(xa_ref[0, :, 0])
    acc_ref[...] = fdot(full0, w01_ref[0])
    acc_ref[...] += fdot(ev0, w2_ref[0])

    # kh = 1 (odd row of each pair).
    full1, ev1 = taps(xa_ref[0, :, 1])
    acc_ref[...] += fdot(full1, w01_ref[1])
    acc_ref[...] += fdot(ev1, w2_ref[1])

    # kh = 2 (even row of the NEXT pair): bulk part comes from this tile ...
    if TH > 1:
        fullb, evb = taps(xa_ref[0, 1:TH, 0])
        acc_ref[0:(TH - 1) * WB] += fdot(fullb, w01_ref[2])
        acc_ref[0:(TH - 1) * WB] += fdot(evb, w2_ref[2])
    # ... plus the 1-row halo for the tile's last output row (no scratch copy).
    fullh, evh = taps(xb_ref[0, :, 0])
    acc_ref[(TH - 1) * WB:M] += fdot(fullh, w01_ref[2])
    acc_ref[(TH - 1) * WB:M] += fdot(evh, w2_ref[2])

    o_ref[0] = (acc_ref[...] + b_ref[...]).astype(o_ref.dtype)


def _pick_row_tile(n_outer, H_out, WB, C, CpT, itemsize, budget):
    C2 = 2 * C
    # TH-independent blocks: double-buffered weights + bias + halo row-pair.
    fixed = (2 * 3 * (C2 + C) * CpT * itemsize
             + 2 * CpT * 4
             + 2 * 2 * WB * C2 * itemsize)

    def cost(t):
        xa = 2 * t * 2 * WB * C2 * itemsize      # input tile, double-buffered
        out = 2 * t * WB * CpT * itemsize        # output tile, double-buffered
        acc = t * WB * CpT * 4                   # f32 accumulator scratch
        tmp = 2 * t * WB * C2 * itemsize         # slab / rolled-slab temporaries
        return fixed + xa + out + acc + tmp

    cands = [t for t in range(1, H_out + 1) if H_out % t == 0]
    if n_outer == 1 and H_out > 1:
        # keep >= 2 grid steps so both v7x TensorCores get work.
        cands = [t for t in cands if H_out // t >= 2]
    fit = [t for t in cands if cost(t) <= budget]
    return max(fit) if fit else 1


@jax.jit
def _conv_downsample(x_nchw, weight_oihw, bias):
    N, C, H, W = x_nchw.shape
    K, S, P = 3, 2, 1
    H_out = (H + 2 * P - K) // S + 1
    W_out = (W + 2 * P - K) // S + 1
    dtype = x_nchw.dtype
    itemsize = jnp.dtype(dtype).itemsize

    Cp = _round_up(C, 128)                # lane-dense output channels
    WB = _round_up(W_out + 1, 8)          # packed column pairs, sublane-aligned
    C2 = 2 * C

    # NCHW -> NHWC, pad so padded spatial dims are exactly 2*(H_out+1) x 2*WB.
    # The reshape below is free: x2[n, a, ph, b, pw*C + c] == xp[n, 2a+ph, 2b+pw, c]
    x = jnp.transpose(x_nchw, (0, 2, 3, 1))
    Hp, Wp = 2 * (H_out + 1), 2 * WB
    xp = jnp.pad(x, ((0, 0), (P, Hp - H - P), (P, Wp - W - P), (0, 0)))
    x2 = xp.reshape(N, H_out + 1, 2, WB, C2)

    # torch (C_out, C_in, kh, kw) -> (kh, kw, C_in, C_out), pad C_out.
    #   w01[kh] = [W[kh,0]; W[kh,1]] (K=2C), w2[kh] = W[kh,2] (K=C) -> 9C real taps,
    #   no zero-padded weight half.
    # TODO(synk): optionally cast x2/w01/w2 to bf16 for the MXU when the model
    # runs f32 (keep preferred_element_type=f32); left off to match f32 numerics.
    w = jnp.transpose(weight_oihw, (2, 3, 1, 0)).astype(dtype)
    w = jnp.pad(w, ((0, 0), (0, 0), (0, 0), (0, Cp - C)))
    w01 = jnp.concatenate([w[:, 0], w[:, 1]], axis=1)        # (3, 2C, Cp)
    w2 = w[:, 2]                                             # (3,  C, Cp)
    b2 = jnp.pad(bias.astype(jnp.float32), (0, Cp - C)).reshape(1, Cp)

    budget, vmem_limit = _vmem_budget()

    # Tile the output-channel dim if the (double-buffered) weight blocks would
    # otherwise dominate the per-tile VMEM budget (large C, f32).
    def _wbytes(cpt):
        return 2 * 3 * (C2 + C) * cpt * itemsize
    q = Cp // 128
    d = q
    while d > 1 and (q % d != 0 or _wbytes(128 * d) > max(budget // 2, 4 << 20)):
        d -= 1
    CpT = 128 * d
    CO = Cp // CpT

    TH = _pick_row_tile(N * CO, H_out, WB, C, CpT, itemsize, budget)
    T = H_out // TH

    out = pl.pallas_call(
        _conv_down_kernel,
        out_shape=jax.ShapeDtypeStruct((N, H_out * WB, Cp), dtype),
        grid=(N, T, CO),
        in_specs=[
            pl.BlockSpec((1, TH, 2, WB, C2), lambda n, t, co: (n, t, 0, 0, 0)),
            pl.BlockSpec((1, 1, 2, WB, C2),
                         lambda n, t, co: (n, (t + 1) * TH, 0, 0, 0)),
            pl.BlockSpec((3, C2, CpT), lambda n, t, co: (0, 0, co)),
            pl.BlockSpec((3, C, CpT), lambda n, t, co: (0, 0, co)),
            pl.BlockSpec((1, CpT), lambda n, t, co: (0, co)),
        ],
        out_specs=pl.BlockSpec((1, TH * WB, CpT), lambda n, t, co: (n, t, co)),
        scratch_shapes=[pltpu.VMEM((TH * WB, CpT), jnp.float32)],
        compiler_params=pltpu.CompilerParams(
            dimension_semantics=("parallel", "parallel", "parallel"),
            vmem_limit_bytes=vmem_limit),
    )(x2, x2, w01, w2, b2)

    out = out.reshape(N, H_out, WB, Cp)[:, :, :W_out, :C]
    return jnp.transpose(out, (0, 3, 1, 2))                   # back to NCHW


# ----------------------- with_conv=False: avg_pool2d(kernel=2, stride=2) -----------------------

def _avgpool_kernel(x_ref, p_ref, o_ref):
    # (BM, Kc) @ (Kc, Wl) block-diagonal pooling matrix on the MXU, f32 acc.
    o_ref[...] = jnp.dot(x_ref[...], p_ref[...],
                         preferred_element_type=jnp.float32).astype(o_ref.dtype)


def _fold_bands(M, Wo):
    # Fold k 2-row bands per matmul row so the output last dim is >= 128
    # (unmasked full-width stores).  k must divide M for a free reshape.
    if Wo >= 128 or M <= 1:
        return 1
    target = -(-128 // Wo)
    limit = min(M, 8 * target)           # bound the pooling-matrix blow-up
    k = 1
    for cand in range(2, limit + 1):
        if M % cand == 0:
            k = cand
            if cand >= target:
                break
    return k


@jax.jit
def _avgpool_downsample(x_nchw):
    N, C, H, W = x_nchw.shape
    Ho, Wo = H // 2, W // 2
    dtype = x_nchw.dtype
    itemsize = jnp.dtype(dtype).itemsize

    x = x_nchw if H % 2 == 0 else x_nchw[:, :, :2 * Ho, :]
    M = N * C * Ho
    k = _fold_bands(M, Wo)
    Mf = M // k
    Kc = k * 2 * W                        # folded input row (k bands)
    Wl = k * Wo                           # folded, lane-dense output row
    x4 = x.reshape(Mf, Kc)                # free reshape

    # Block-diagonal pooling matrix: band b, column w -> output (b, (w % W)//2).
    r = jnp.arange(Kc)[:, None]
    c = jnp.arange(Wl)[None, :]
    pool_mat = jnp.where((r // (2 * W) == c // Wo) & ((r % W) // 2 == c % Wo),
                         0.25, 0.0).astype(dtype)

    budget, vmem_limit = _vmem_budget()
    blk_bytes = min(8 * 1024 * 1024, budget)       # ~8 MiB streaming input blocks
    bm = min(Mf, max(8, blk_bytes // (Kc * itemsize)))
    if bm < Mf:
        bm = max(8, (bm // 8) * 8)

    out = pl.pallas_call(
        _avgpool_kernel,
        out_shape=jax.ShapeDtypeStruct((Mf, Wl), dtype),
        grid=(pl.cdiv(Mf, bm),),
        in_specs=[pl.BlockSpec((bm, Kc), lambda i: (i, 0)),
                  pl.BlockSpec((Kc, Wl), lambda i: (0, 0))],
        out_specs=pl.BlockSpec((bm, Wl), lambda i: (i, 0)),
        compiler_params=pltpu.CompilerParams(
            dimension_semantics=("parallel",),
            vmem_limit_bytes=vmem_limit),
    )(x4, pool_mat)
    return out.reshape(N, C, Ho, Wo)


# ----------------------- module wrapper -----------------------

class Downsample:
    def __init__(self, in_channels, with_conv, spatial_dims=2, key=None):
        self.with_conv = with_conv
        self.spatial_dims = spatial_dims
        if self.with_conv:
            if spatial_dims != 2:
                # TODO(synk): spatial_dims=3 (Conv3d) variant not implemented here.
                raise NotImplementedError("Only spatial_dims=2 is implemented.")
            key = jax.random.PRNGKey(0) if key is None else key
            kw, kb = jax.random.split(key)
            fan_in = in_channels * 3 * 3
            bound = 1.0 / (fan_in ** 0.5)        # matches nn.Conv2d default init range
            self.weight = jax.random.uniform(
                kw, (in_channels, in_channels, 3, 3), jnp.float32, -bound, bound)
            self.bias = jax.random.uniform(
                kb, (in_channels,), jnp.float32, -bound, bound)

    def __call__(self, x):
        if self.with_conv:
            return _conv_downsample(x, self.weight, self.bias)
        elif self.spatial_dims == 2:
            return _avgpool_downsample(x)
        else:
            # TODO(synk): avg_pool3d (spatial_dims=3) path not implemented here.
            raise NotImplementedError("Only spatial_dims=2 is implemented.")


if __name__ == "__main__":
    key = jax.random.PRNGKey(0)
    kx, kp, kx2, kx3 = jax.random.split(key, 4)
    x = jax.random.normal(kx, (2, 4, 16, 16), jnp.float32)           # NCHW

    # --- with_conv=True path ---
    down_conv = Downsample(in_channels=4, with_conv=True, key=kp)
    y_conv = jax.block_until_ready(down_conv(x))
    ref_conv = jax.lax.conv_general_dilated(
        x, down_conv.weight, window_strides=(2, 2), padding=((1, 1), (1, 1)),
        dimension_numbers=("NCHW", "OIHW", "NCHW"))
    ref_conv = ref_conv + down_conv.bias.reshape(1, -1, 1, 1)
    assert y_conv.shape == (2, 4, 8, 8), y_conv.shape
    assert jnp.allclose(y_conv, ref_conv, atol=1e-4, rtol=1e-4)

    # odd spatial dims, C not a multiple of 128, W_out not a multiple of 8
    x_odd = jax.random.normal(kx2, (1, 3, 7, 9), jnp.float32)
    down_conv3 = Downsample(in_channels=3, with_conv=True, key=kp)
    y_odd = jax.block_until_ready(down_conv3(x_odd))
    ref_odd = jax.lax.conv_general_dilated(
        x_odd, down_conv3.weight, window_strides=(2, 2), padding=((1, 1), (1, 1)),
        dimension_numbers=("NCHW", "OIHW", "NCHW"))
    ref_odd = ref_odd + down_conv3.bias.reshape(1, -1, 1, 1)
    assert y_odd.shape == (1, 3, 4, 5), y_odd.shape
    assert jnp.allclose(y_odd, ref_odd, atol=1e-4, rtol=1e-4)

    # --- with_conv=False path (avg_pool2d k=2 s=2) ---
    down_pool = Downsample(in_channels=4, with_conv=False)
    y_pool = jax.block_until_ready(down_pool(x))
    ref_pool = x.reshape(2, 4, 8, 2, 8, 2).mean(axis=(3, 5))
    assert y_pool.shape == (2, 4, 8, 8), y_pool.shape
    assert jnp.allclose(y_pool, ref_pool, atol=1e-5, rtol=1e-5)

    # odd spatial dims (floor behaviour of avg_pool2d)
    x_po = jax.random.normal(kx3, (2, 3, 9, 7), jnp.float32)
    y_po = jax.block_until_ready(Downsample(in_channels=3, with_conv=False)(x_po))
    ref_po = x_po[:, :, :8, :6].reshape(2, 3, 4, 2, 3, 2).mean(axis=(3, 5))
    assert y_po.shape == (2, 3, 4, 3), y_po.shape
    assert jnp.allclose(y_po, ref_po, atol=1e-5, rtol=1e-5)

    print("KERNEL_OK")
</pallas_src>

<mosaic_0001>
module attributes {stable_mosaic.version = 11 : i64} {
  func.func @_conv_down_kernel(%arg0: i32, %arg1: i32, %arg2: i32, %arg3: memref<1x8x2x16x8xf32, #tpu.memory_space<vmem>>, %arg4: memref<1x1x2x16x8xf32, #tpu.memory_space<vmem>>, %arg5: memref<3x8x128xf32, #tpu.memory_space<vmem>>, %arg6: memref<3x4x128xf32, #tpu.memory_space<vmem>>, %arg7: memref<1x128xf32, #tpu.memory_space<vmem>>, %arg8: memref<1x128x128xf32, #tpu.memory_space<vmem>>, %arg9: memref<128x128xf32, #tpu.memory_space<vmem>>) attributes {dimension_semantics = [#tpu.dimension_semantics<parallel>, #tpu.dimension_semantics<parallel>, #tpu.dimension_semantics<parallel>], iteration_bounds = array<i64: 2, 1, 1>, scalar_prefetch = 0 : i64, scratch_operands = 1 : i64, tpu.core_type = #tpu.core_type<tc>, window_params = [{transform_indices = @transform_0, window_bounds = array<i64: 1, 8, 2, 16, 8>}, {transform_indices = @transform_1, window_bounds = array<i64: 1, 1, 2, 16, 8>}, {transform_indices = @transform_2, window_bounds = array<i64: 3, 8, 128>}, {transform_indices = @transform_3, window_bounds = array<i64: 3, 4, 128>}, {transform_indices = @transform_4, window_bounds = array<i64: 1, 128>}, {transform_indices = @transform_5, window_bounds = array<i64: 1, 128, 128>}]} {
    %c0 = arith.constant 0 : index
    %c0_0 = arith.constant 0 : index
    %c0_1 = arith.constant 0 : index
    %c0_2 = arith.constant 0 : index
    %c0_3 = arith.constant 0 : index
    %0 = vector.load %arg3[%c0, %c0_0, %c0_1, %c0_2, %c0_3] : memref<1x8x2x16x8xf32, #tpu.memory_space<vmem>>, vector<1x8x1x16x8xf32>
    %1 = vector.shape_cast %0 : vector<1x8x1x16x8xf32> to vector<8x16x8xf32>
    %2 = vector.shape_cast %1 : vector<8x16x8xf32> to vector<128x8xf32>
    %3 = vector.extract_strided_slice %2 {offsets = [0, 0], sizes = [128, 4], strides = [1, 1]} : vector<128x8xf32> to vector<128x4xf32>
    %c127_i32 = arith.constant 127 : i32
    %4 = tpu.dynamic_rotate %3 by %c127_i32 dim 0 : vector<128x4xf32>, i32 -> vector<128x4xf32>
    %c0_4 = arith.constant 0 : index
    %c0_5 = arith.constant 0 : index
    %c0_6 = arith.constant 0 : index
    %5 = vector.load %arg5[%c0_4, %c0_5, %c0_6] : memref<3x8x128xf32, #tpu.memory_space<vmem>>, vector<1x8x128xf32>
    %6 = vector.shape_cast %5 : vector<1x8x128xf32> to vector<8x128xf32>
    %cst = arith.constant dense<0.000000e+00> : vector<128x128xf32>
    %7 = tpu.matmul %2, %6, %cst {dimension_numbers = #tpu.dot_dimension_numbers<[1], [0], [0], [1], [0, 0, 1, 1], [], []>} : vector<128x8xf32>, vector<8x128xf32>, vector<128x128xf32> -> vector<128x128xf32>
    %c0_7 = arith.constant 0 : index
    %c0_8 = arith.constant 0 : index
    %8 = vector.load %arg9[%c0_7, %c0_8] : memref<128x128xf32, #tpu.memory_space<vmem>>, vector<128x128xf32>
    tpu.vector_store %arg9[%c0_7, %c0_8], %7 {strides = array<i32>} : memref<128x128xf32, #tpu.memory_space<vmem>>, vector<128x128xf32>,
    %c0_9 = arith.constant 0 : index
    %c0_10 = arith.constant 0 : index
    %9 = vector.load %arg9[%c0_9, %c0_10] : memref<128x128xf32, #tpu.memory_space<vmem>>, vector<128x128xf32>
    %c0_11 = arith.constant 0 : index
    %c0_12 = arith.constant 0 : index
    %c0_13 = arith.constant 0 : index
    %10 = vector.load %arg6[%c0_11, %c0_12, %c0_13] : memref<3x4x128xf32, #tpu.memory_space<vmem>>, vector<1x4x128xf32>
    %11 = vector.shape_cast %10 : vector<1x4x128xf32> to vector<4x128xf32>
    %cst_14 = arith.constant dense<0.000000e+00> : vector<128x128xf32>
    %12 = tpu.matmul %4, %11, %cst_14 {dimension_numbers = #tpu.dot_dimension_numbers<[1], [0], [0], [1], [0, 0, 1, 1], [], []>} : vector<128x4xf32>, vector<4x128xf32>, vector<128x128xf32> -> vector<128x128xf32>
    %13 = arith.addf %9, %12 : vector<128x128xf32>
    %c0_15 = arith.constant 0 : index
    %c0_16 = arith.constant 0 : index
    %14 = vector.load %arg9[%c0_15, %c0_16] : memref<128x128xf32, #tpu.memory_space<vmem>>, vector<128x128xf32>
    tpu.vector_store %arg9[%c0_15, %c0_16], %13 {strides = array<i32>} : memref<128x128xf32, #tpu.memory_space<vmem>>, vector<128x128xf32>,
    %c0_17 = arith.constant 0 : index
    %c0_18 = arith.constant 0 : index
    %c1 = arith.constant 1 : index
    %c0_19 = arith.constant 0 : index
    %c0_20 = arith.constant 0 : index
    %15 = vector.load %arg3[%c0_17, %c0_18, %c1, %c0_19, %c0_20] : memref<1x8x2x16x8xf32, #tpu.memory_space<vmem>>, vector<1x8x1x16x8xf32>
    %16 = vector.shape_cast %15 : vector<1x8x1x16x8xf32> to vector<8x16x8xf32>
    %17 = vector.shape_cast %16 : vector<8x16x8xf32> to vector<128x8xf32>
    %18 = vector.extract_strided_slice %17 {offsets = [0, 0], sizes = [128, 4], strides = [1, 1]} : vector<128x8xf32> to vector<128x4xf32>
    %c127_i32_21 = arith.constant 127 : i32
    %19 = tpu.dynamic_rotate %18 by %c127_i32_21 dim 0 : vector<128x4xf32>, i32 -> vector<128x4xf32>
    %c0_22 = arith.constant 0 : index
    %c0_23 = arith.constant 0 : index
    %20 = vector.load %arg9[%c0_22, %c0_23] : memref<128x128xf32, #tpu.memory_space<vmem>>, vector<128x128xf32>
    %c1_24 = arith.constant 1 : index
    %c0_25 = arith.constant 0 : index
    %c0_26 = arith.constant 0 : index
    %21 = vector.load %arg5[%c1_24, %c0_25, %c0_26] : memref<3x8x128xf32, #tpu.memory_space<vmem>>, vector<1x8x128xf32>
    %22 = vector.shape_cast %21 : vector<1x8x128xf32> to vector<8x128xf32>
    %cst_27 = arith.constant dense<0.000000e+00> : vector<128x128xf32>
    %23 = tpu.matmul %17, %22, %cst_27 {dimension_numbers = #tpu.dot_dimension_numbers<[1], [0], [0], [1], [0, 0, 1, 1], [], []>} : vector<128x8xf32>, vector<8x128xf32>, vector<128x128xf32> -> vector<128x128xf32>
    %24 = arith.addf %20, %23 : vector<128x128xf32>
    %c0_28 = arith.constant 0 : index
    %c0_29 = arith.constant 0 : index
    %25 = vector.load %arg9[%c0_28, %c0_29] : memref<128x128xf32, #tpu.memory_space<vmem>>, vector<128x128xf32>
    tpu.vector_store %arg9[%c0_28, %c0_29], %24 {strides = array<i32>} : memref<128x128xf32, #tpu.memory_space<vmem>>, vector<128x128xf32>,
    %c0_30 = arith.constant 0 : index
    %c0_31 = arith.constant 0 : index
    %26 = vector.load %arg9[%c0_30, %c0_31] : memref<128x128xf32, #tpu.memory_space<vmem>>, vector<128x128xf32>
    %c1_32 = arith.constant 1 : index
    %c0_33 = arith.constant 0 : index
    %c0_34 = arith.constant 0 : index
    %27 = vector.load %arg6[%c1_32, %c0_33, %c0_34] : memref<3x4x128xf32, #tpu.memory_space<vmem>>, vector<1x4x128xf32>
    %28 = vector.shape_cast %27 : vector<1x4x128xf32> to vector<4x128xf32>
    %cst_35 = arith.constant dense<0.000000e+00> : vector<128x128xf32>
    %29 = tpu.matmul %19, %28, %cst_35 {dimension_numbers = #tpu.dot_dimension_numbers<[1], [0], [0], [1], [0, 0, 1, 1], [], []>} : vector<128x4xf32>, vector<4x128xf32>, vector<128x128xf32> -> vector<128x128xf32>
    %30 = arith.addf %26, %29 : vector<128x128xf32>
    %c0_36 = arith.constant 0 : index
    %c0_37 = arith.constant 0 : index
    %31 = vector.load %arg9[%c0_36, %c0_37] : memref<128x128xf32, #tpu.memory_space<vmem>>, vector<128x128xf32>
    tpu.vector_store %arg9[%c0_36, %c0_37], %30 {strides = array<i32>} : memref<128x128xf32, #tpu.memory_space<vmem>>, vector<128x128xf32>,
    %c0_38 = arith.constant 0 : index
    %c1_39 = arith.constant 1 : index
    %c0_40 = arith.constant 0 : index
    %c0_41 = arith.constant 0 : index
    %c0_42 = arith.constant 0 : index
    %32 = vector.load %arg3[%c0_38, %c1_39, %c0_40, %c0_41, %c0_42] : memref<1x8x2x16x8xf32, #tpu.memory_space<vmem>>, vector<1x7x1x16x8xf32>
    %33 = vector.shape_cast %32 : vector<1x7x1x16x8xf32> to vector<7x16x8xf32>
    %34 = vector.shape_cast %33 : vector<7x16x8xf32> to vector<112x8xf32>
    %35 = vector.extract_strided_slice %34 {offsets = [0, 0], sizes = [112, 4], strides = [1, 1]} : vector<112x8xf32> to vector<112x4xf32>
    %c111_i32 = arith.constant 111 : i32
    %36 = tpu.dynamic_rotate %35 by %c111_i32 dim 0 : vector<112x4xf32>, i32 -> vector<112x4xf32>
    %c0_43 = arith.constant 0 : index
    %c0_44 = arith.constant 0 : index
    %37 = vector.load %arg9[%c0_43, %c0_44] : memref<128x128xf32, #tpu.memory_space<vmem>>, vector<112x128xf32>
    %c2 = arith.constant 2 : index
    %c0_45 = arith.constant 0 : index
    %c0_46 = arith.constant 0 : index
    %38 = vector.load %arg5[%c2, %c0_45, %c0_46] : memref<3x8x128xf32, #tpu.memory_space<vmem>>, vector<1x8x128xf32>
    %39 = vector.shape_cast %38 : vector<1x8x128xf32> to vector<8x128xf32>
    %cst_47 = arith.constant dense<0.000000e+00> : vector<112x128xf32>
    %40 = tpu.matmul %34, %39, %cst_47 {dimension_numbers = #tpu.dot_dimension_numbers<[1], [0], [0], [1], [0, 0, 1, 1], [], []>} : vector<112x8xf32>, vector<8x128xf32>, vector<112x128xf32> -> vector<112x128xf32>
    %41 = arith.addf %37, %40 : vector<112x128xf32>
    %c0_48 = arith.constant 0 : index
    %c0_49 = arith.constant 0 : index
    %42 = vector.load %arg9[%c0_48, %c0_49] : memref<128x128xf32, #tpu.memory_space<vmem>>, vector<112x128xf32>
    tpu.vector_store %arg9[%c0_48, %c0_49], %41 {strides = array<i32>} : memref<128x128xf32, #tpu.memory_space<vmem>>, vector<112x128xf32>,
    %c0_50 = arith.constant 0 : index
    %c0_51 = arith.constant 0 : index
    %43 = vector.load %arg9[%c0_50, %c0_51] : memref<128x128xf32, #tpu.memory_space<vmem>>, vector<112x128xf32>
    %c2_52 = arith.constant 2 : index
    %c0_53 = arith.constant 0 : index
    %c0_54 = arith.constant 0 : index
    %44 = vector.load %arg6[%c2_52, %c0_53, %c0_54] : memref<3x4x128xf32, #tpu.memory_space<vmem>>, vector<1x4x128xf32>
    %45 = vector.shape_cast %44 : vector<1x4x128xf32> to vector<4x128xf32>
    %cst_55 = arith.constant dense<0.000000e+00> : vector<112x128xf32>
    %46 = tpu.matmul %36, %45, %cst_55 {dimension_numbers = #tpu.dot_dimension_numbers<[1], [0], [0], [1], [0, 0, 1, 1], [], []>} : vector<112x4xf32>, vector<4x128xf32>, vector<112x128xf32> -> vector<112x128xf32>
    %47 = arith.addf %43, %46 : vector<112x128xf32>
    %c0_56 = arith.constant 0 : index
    %c0_57 = arith.constant 0 : index
    %48 = vector.load %arg9[%c0_56, %c0_57] : memref<128x128xf32, #tpu.memory_space<vmem>>, vector<112x128xf32>
    tpu.vector_store %arg9[%c0_56, %c0_57], %47 {strides = array<i32>} : memref<128x128xf32, #tpu.memory_space<vmem>>, vector<112x128xf32>,
    %c0_58 = arith.constant 0 : index
    %c0_59 = arith.constant 0 : index
    %c0_60 = arith.constant 0 : index
    %c0_61 = arith.constant 0 : index
    %c0_62 = arith.constant 0 : index
    %49 = vector.load %arg4[%c0_58, %c0_59, %c0_60, %c0_61, %c0_62] : memref<1x1x2x16x8xf32, #tpu.memory_space<vmem>>, vector<1x1x1x16x8xf32>
    %50 = vector.shape_cast %49 : vector<1x1x1x16x8xf32> to vector<1x16x8xf32>
    %51 = vector.shape_cast %50 : vector<1x16x8xf32> to vector<16x8xf32>
    %52 = vector.extract_strided_slice %51 {offsets = [0, 0], sizes = [16, 4], strides = [1, 1]} : vector<16x8xf32> to vector<16x4xf32>
    %c15_i32 = arith.constant 15 : i32
    %53 = tpu.dynamic_rotate %52 by %c15_i32 dim 0 : vector<16x4xf32>, i32 -> vector<16x4xf32>
    %c112 = arith.constant 112 : index
    %c0_63 = arith.constant 0 : index
    %54 = vector.load %arg9[%c112, %c0_63] : memref<128x128xf32, #tpu.memory_space<vmem>>, vector<16x128xf32>
    %c2_64 = arith.constant 2 : index
    %c0_65 = arith.constant 0 : index
    %c0_66 = arith.constant 0 : index
    %55 = vector.load %arg5[%c2_64, %c0_65, %c0_66] : memref<3x8x128xf32, #tpu.memory_space<vmem>>, vector<1x8x128xf32>
    %56 = vector.shape_cast %55 : vector<1x8x128xf32> to vector<8x128xf32>
    %cst_67 = arith.constant dense<0.000000e+00> : vector<16x128xf32>
    %57 = tpu.matmul %51, %56, %cst_67 {dimension_numbers = #tpu.dot_dimension_numbers<[1], [0], [0], [1], [0, 0, 1, 1], [], []>} : vector<16x8xf32>, vector<8x128xf32>, vector<16x128xf32> -> vector<16x128xf32>
    %58 = arith.addf %54, %57 : vector<16x128xf32>
    %c112_68 = arith.constant 112 : index
    %c0_69 = arith.constant 0 : index
    %59 = vector.load %arg9[%c112_68, %c0_69] : memref<128x128xf32, #tpu.memory_space<vmem>>, vector<16x128xf32>
    tpu.vector_store %arg9[%c112_68, %c0_69], %58 {strides = array<i32>} : memref<128x128xf32, #tpu.memory_space<vmem>>, vector<16x128xf32>,
    %c112_70 = arith.constant 112 : index
    %c0_71 = arith.constant 0 : index
    %60 = vector.load %arg9[%c112_70, %c0_71] : memref<128x128xf32, #tpu.memory_space<vmem>>, vector<16x128xf32>
    %c2_72 = arith.constant 2 : index
    %c0_73 = arith.constant 0 : index
    %c0_74 = arith.constant 0 : index
    %61 = vector.load %arg6[%c2_72, %c0_73, %c0_74] : memref<3x4x128xf32, #tpu.memory_space<vmem>>, vector<1x4x128xf32>
    %62 = vector.shape_cast %61 : vector<1x4x128xf32> to vector<4x128xf32>
    %cst_75 = arith.constant dense<0.000000e+00> : vector<16x128xf32>
    %63 = tpu.matmul %53, %62, %cst_75 {dimension_numbers = #tpu.dot_dimension_numbers<[1], [0], [0], [1], [0, 0, 1, 1], [], []>} : vector<16x4xf32>, vector<4x128xf32>, vector<16x128xf32> -> vector<16x128xf32>
    %64 = arith.addf %60, %63 : vector<16x128xf32>
    %c112_76 = arith.constant 112 : index
    %c0_77 = arith.constant 0 : index
    %65 = vector.load %arg9[%c112_76, %c0_77] : memref<128x128xf32, #tpu.memory_space<vmem>>, vector<16x128xf32>
    tpu.vector_store %arg9[%c112_76, %c0_77], %64 {strides = array<i32>} : memref<128x128xf32, #tpu.memory_space<vmem>>, vector<16x128xf32>,
    %c0_78 = arith.constant 0 : index
    %c0_79 = arith.constant 0 : index
    %66 = vector.load %arg9[%c0_78, %c0_79] : memref<128x128xf32, #tpu.memory_space<vmem>>, vector<128x128xf32>
    %c0_80 = arith.constant 0 : index
    %c0_81 = arith.constant 0 : index
    %67 = vector.load %arg7[%c0_80, %c0_81] : memref<1x128xf32, #tpu.memory_space<vmem>>, vector<1x128xf32>
    %68 = vector.broadcast %67 : vector<1x128xf32> to vector<128x128xf32>
    %69 = arith.addf %66, %68 : vector<128x128xf32>
    %c0_82 = arith.constant 0 : index
    %c0_83 = arith.constant 0 : index
    %c0_84 = arith.constant 0 : index
    %70 = vector.load %arg8[%c0_82, %c0_83, %c0_84] : memref<1x128x128xf32, #tpu.memory_space<vmem>>, vector<1x128x128xf32>
    %71 = vector.shape_cast %70 : vector<1x128x128xf32> to vector<128x128xf32>
    %72 = vector.shape_cast %69 : vector<128x128xf32> to vector<1x128x128xf32>
    tpu.vector_store %arg8[%c0_82, %c0_83, %c0_84], %72 {strides = array<i32>} : memref<1x128x128xf32, #tpu.memory_space<vmem>>, vector<1x128x128xf32>,
    return
  }
  func.func @transform_0(%arg0: i32, %arg1: i32, %arg2: i32) -> (i32, i32, i32, i32, i32) {
    %c0_i32 = arith.constant 0 : i32
    %c0_i32_0 = arith.constant 0 : i32
    %c0_i32_1 = arith.constant 0 : i32
    %c0_i32_2 = arith.constant 0 : i32
    return %arg0, %arg1, %c0_i32, %c0_i32_0, %c0_i32_1 : i32, i32, i32, i32, i32
  }
  func.func @transform_1(%arg0: i32, %arg1: i32, %arg2: i32) -> (i32, i32, i32, i32, i32) {
    %c1_i32 = arith.constant 1 : i32
    %0 = arith.addi %arg1, %c1_i32 : i32
    %c8_i32 = arith.constant 8 : i32
    %1 = arith.muli %0, %c8_i32 : i32
    %c0_i32 = arith.constant 0 : i32
    %c0_i32_0 = arith.constant 0 : i32
    %c0_i32_1 = arith.constant 0 : i32
    %c0_i32_2 = arith.constant 0 : i32
    return %arg0, %1, %c0_i32, %c0_i32_0, %c0_i32_1 : i32, i32, i32, i32, i32
  }
  func.func @transform_2(%arg0: i32, %arg1: i32, %arg2: i32) -> (i32, i32, i32) {
    %c0_i32 = arith.constant 0 : i32
    %c0_i32_0 = arith.constant 0 : i32
    %c0_i32_1 = arith.constant 0 : i32
    return %c0_i32, %c0_i32_0, %arg2 : i32, i32, i32
  }
  func.func @transform_3(%arg0: i32, %arg1: i32, %arg2: i32) -> (i32, i32, i32) {
    %c0_i32 = arith.constant 0 : i32
    %c0_i32_0 = arith.constant 0 : i32
    %c0_i32_1 = arith.constant 0 : i32
    return %c0_i32, %c0_i32_0, %arg2 : i32, i32, i32
  }
  func.func @transform_4(%arg0: i32, %arg1: i32, %arg2: i32) -> (i32, i32) {
    %c0_i32 = arith.constant 0 : i32
    %c0_i32_0 = arith.constant 0 : i32
    return %c0_i32, %arg2 : i32, i32
  }
  func.func @transform_5(%arg0: i32, %arg1: i32, %arg2: i32) -> (i32, i32, i32) {
    %c0_i32 = arith.constant 0 : i32
    return %arg0, %arg1, %arg2 : i32, i32, i32
  }
}

</mosaic_0001>

<llo_original>
// kernel: _conv_downsample.1
$region0: #{_conv_downsample.1}
  #allocation0 [shape = 'u32[]', space=smem, size = 0x4, offset = 0x4, fixed_abs, tag = 'smem constant byte address 0x4 - core index']
  #allocation1 [shape = 'u32[144,128]{1,0:T(1,128)}', space=vmem, size = 0x12000, scoped, tag = 'internal scratch']
  #allocation2 [shape = 'f32[128,128]{1,0:T(8,128)}', space=vmem, size = 0x10000, scoped, tag = 'scratch operand']
  %s0 = inlined_call_operand.vmem [shape: f32[2,9,2,16,8], index: 0, kind: input, shape index: {}, may-alias: {0,1}]
  %s1 = inlined_call_operand.vmem [shape: f32[2,9,2,16,8], index: 1, kind: input, shape index: {}, may-alias: {0,1}]
  %s2 = inlined_call_operand.vmem [shape: f32[3,8,128], index: 2, kind: input, shape index: {}]
  %s3 = inlined_call_operand.vmem [shape: f32[3,4,128], index: 3, kind: input, shape index: {}]
  %s4 = inlined_call_operand.vmem [shape: f32[1,128], index: 4, kind: input, shape index: {}]
  %s5 = inlined_call_operand.vmem [shape: f32[2,128,128], index: 5, kind: output, shape index: {}]
  %s6 = sld [smem:[#allocation0]]
  $region53: #{_conv_downsample.1} parent=0
    _
  %s8 = ssub.s32 1, %s6
  %s9 = scalar_select 0, %s8, %s6
  loop: start=0, step=1, limit=4
  $region2: #{_conv_downsample.1} parent=0 // loop_pre_header
    _
  $region3: #{_conv_downsample.1} parent=0 // loop_header
    %s11 = sphi 0, %s15
    %p12 = scmp.ge.s32.totalorder %s11, 4
    %s18 = sphi 0, %s37
    %s19 = sphi 0, %s33
    %s20 = sphi 0, %s29
    %s21 = sphi 0, %s18
    %s22 = sphi 0, %s19
    %s23 = sphi 0, %s20
    %s24 = sphi 0, %s21
    %s25 = sphi 0, %s22
    %s26 = sphi 0, %s23
    %s42 = sphi 0, %s44
    %s45 = sphi 0, %s42
    %s46 = sphi 0, %s45
    %s62 = sphi 0, %s46
    %s74 = sphi 0, %s76
    %s77 = sphi 0, %s74
    %s78 = sphi 0, %s77
    %s94 = sphi 0, %s78
    %s100 = sphi 0, %s102
    %s103 = sphi 0, %s100
    %s104 = sphi 0, %s103
    %s120 = sphi 0, %s104
    %s126 = sphi 0, %s128
    %s129 = sphi 0, %s126
    %s130 = sphi 0, %s129
    %s146 = sphi 0, %s130
    %s152 = sphi 0, %s154
    %s155 = sphi 0, %s152
    %s156 = sphi 0, %s155
    %s172 = sphi 0, %s156
    %s182 = sphi 0, %s184
    %s185 = sphi 0, %s182
    %s186 = sphi 0, %s185
    %s202 = sphi 0, %s186
  $region4: #{_conv_downsample.1} parent=0 // loop_header_branch
    %14 = sbr.rel (%p12) target = $region8
  $region5: #{_conv_downsample.1} parent=0 // loop_body
    %s16 = ssub.s32 %s11, 1
    %s17 = ssub.s32 %s11, 2
    %s27 = sadd.s32 1, %s20
    %p28 = scmp.ge.s32.totalorder %s27, 1
    %s29 = scalar_select %p28, 0, %s27
    %s30 = sadd.s32 1, %s19
    %s31 = scalar_select %p28, %s30, %s19
    %p32 = scmp.ge.s32.totalorder %s31, 1
    %s33 = scalar_select %p32, 0, %s31
    %s34 = sadd.s32 1, %s18
    %s35 = scalar_select %p32, %s34, %s18
    %p36 = scmp.ge.s32.totalorder %s35, 2
    %s37 = scalar_select %p36, 0, %s35
    %s38 = ssub.s32 %s18, %s37
    %s39 = ssub.s32 %s19, %s33
    %s40 = sor.u32 %s38, %s39
    %p41 = scmp.eq.s32.totalorder %s40, 0
    %s43 = sadd.s32 %s42, 1
    %s44 = scalar_select %p41, %s42, %s43
    %p47 = pneg %p41
    %p48 = scmp.eq.s32.totalorder %s11, 1
    %p49 = por %p47, %p48
    %p50 = scmp.ne.s32.totalorder %s42, %s45
    %p51 = scmp.eq.s32.totalorder %s11, 0
    %p52 = por %p50, %p51
    %p53 = scmp.ne.s32.totalorder %s42, %s45
    %p54 = scmp.eq.s32.totalorder %s16, 1
    %p55 = por %p53, %p54
    %p56 = scmp.ne.s32.totalorder %s45, %s46
    %p57 = scmp.eq.s32.totalorder %s16, 0
    %p58 = por %p56, %p57
    %p59 = scmp.ne.s32.totalorder %s45, %s46
    %p60 = scmp.eq.s32.totalorder %s17, 1
    %p61 = por %p59, %p60
    %p63 = scmp.ne.s32.totalorder %s46, %s62
    %p64 = scmp.eq.s32.totalorder %s17, 0
    %p65 = por %p63, %p64
    %s66 = sadd.s32 %s19, 1
    %s67 = smul.u32 %s66, 8
    %s68 = sadd.s32 %s33, 1
    %s69 = smul.u32 %s68, 8
    %s70 = ssub.s32 %s18, %s37
    %s71 = ssub.s32 %s67, %s69
    %s72 = sor.u32 %s70, %s71
    %p73 = scmp.eq.s32.totalorder %s72, 0
    %s75 = sadd.s32 %s74, 1
    %s76 = scalar_select %p73, %s74, %s75
    %p79 = pneg %p73
    %p80 = scmp.eq.s32.totalorder %s11, 1
    %p81 = por %p79, %p80
    %p82 = scmp.ne.s32.totalorder %s74, %s77
    %p83 = scmp.eq.s32.totalorder %s11, 0
    %p84 = por %p82, %p83
    %p85 = scmp.ne.s32.totalorder %s74, %s77
    %p86 = scmp.eq.s32.totalorder %s16, 1
    %p87 = por %p85, %p86
    %p88 = scmp.ne.s32.totalorder %s77, %s78
    %p89 = scmp.eq.s32.totalorder %s16, 0
    %p90 = por %p88, %p89
    %p91 = scmp.ne.s32.totalorder %s77, %s78
    %p92 = scmp.eq.s32.totalorder %s17, 1
    %p93 = por %p91, %p92
    %p95 = scmp.ne.s32.totalorder %s78, %s94
    %p96 = scmp.eq.s32.totalorder %s17, 0
    %p97 = por %p95, %p96
    %s98 = ssub.s32 %s20, %s29
    %p99 = scmp.eq.s32.totalorder %s98, 0
    %s101 = sadd.s32 %s100, 1
    %s102 = scalar_select %p99, %s100, %s101
    %p105 = pneg %p99
    %p106 = scmp.eq.s32.totalorder %s11, 1
    %p107 = por %p105, %p106
    %p108 = scmp.ne.s32.totalorder %s100, %s103
    %p109 = scmp.eq.s32.totalorder %s11, 0
    %p110 = por %p108, %p109
    %p111 = scmp.ne.s32.totalorder %s100, %s103
    %p112 = scmp.eq.s32.totalorder %s16, 1
    %p113 = por %p111, %p112
    %p114 = scmp.ne.s32.totalorder %s103, %s104
    %p115 = scmp.eq.s32.totalorder %s16, 0
    %p116 = por %p114, %p115
    %p117 = scmp.ne.s32.totalorder %s103, %s104
    %p118 = scmp.eq.s32.totalorder %s17, 1
    %p119 = por %p117, %p118
    %p121 = scmp.ne.s32.totalorder %s104, %s120
    %p122 = scmp.eq.s32.totalorder %s17, 0
    %p123 = por %p121, %p122
    %s124 = ssub.s32 %s20, %s29
    %p125 = scmp.eq.s32.totalorder %s124, 0
    %s127 = sadd.s32 %s126, 1
    %s128 = scalar_select %p125, %s126, %s127
    %p131 = pneg %p125
    %p132 = scmp.eq.s32.totalorder %s11, 1
    %p133 = por %p131, %p132
    %p134 = scmp.ne.s32.totalorder %s126, %s129
    %p135 = scmp.eq.s32.totalorder %s11, 0
    %p136 = por %p134, %p135
    %p137 = scmp.ne.s32.totalorder %s126, %s129
    %p138 = scmp.eq.s32.totalorder %s16, 1
    %p139 = por %p137, %p138
    %p140 = scmp.ne.s32.totalorder %s129, %s130
    %p141 = scmp.eq.s32.totalorder %s16, 0
    %p142 = por %p140, %p141
    %p143 = scmp.ne.s32.totalorder %s129, %s130
    %p144 = scmp.eq.s32.totalorder %s17, 1
    %p145 = por %p143, %p144
    %p147 = scmp.ne.s32.totalorder %s130, %s146
    %p148 = scmp.eq.s32.totalorder %s17, 0
    %p149 = por %p147, %p148
    %s150 = ssub.s32 %s20, %s29
    %p151 = scmp.eq.s32.totalorder %s150, 0
    %s153 = sadd.s32 %s152, 1
    %s154 = scalar_select %p151, %s152, %s153
    %p157 = pneg %p151
    %p158 = scmp.eq.s32.totalorder %s11, 1
    %p159 = por %p157, %p158
    %p160 = scmp.ne.s32.totalorder %s152, %s155
    %p161 = scmp.eq.s32.totalorder %s11, 0
    %p162 = por %p160, %p161
    %p163 = scmp.ne.s32.totalorder %s152, %s155
    %p164 = scmp.eq.s32.totalorder %s16, 1
    %p165 = por %p163, %p164
    %p166 = scmp.ne.s32.totalorder %s155, %s156
    %p167 = scmp.eq.s32.totalorder %s16, 0
    %p168 = por %p166, %p167
    %p169 = scmp.ne.s32.totalorder %s155, %s156
    %p170 = scmp.eq.s32.totalorder %s17, 1
    %p171 = por %p169, %p170
    %p173 = scmp.ne.s32.totalorder %s156, %s172
    %p174 = scmp.eq.s32.totalorder %s17, 0
    %p175 = por %p173, %p174
    %s176 = ssub.s32 %s18, %s37
    %s177 = ssub.s32 %s19, %s33
    %s178 = sor.u32 %s176, %s177
    %s179 = ssub.s32 %s20, %s29
    %s180 = sor.u32 %s178, %s179
    %p181 = scmp.eq.s32.totalorder %s180, 0
    %s183 = sadd.s32 %s182, 1
    %s184 = scalar_select %p181, %s182, %s183
    %p187 = pneg %p181
    %p188 = scmp.eq.s32.totalorder %s11, 1
    %p189 = por %p187, %p188
    %p190 = scmp.ne.s32.totalorder %s182, %s185
    %p191 = scmp.eq.s32.totalorder %s11, 0
    %p192 = por %p190, %p191
    %p193 = scmp.ne.s32.totalorder %s182, %s185
    %p194 = scmp.eq.s32.totalorder %s16, 1
    %p195 = por %p193, %p194
    %p196 = scmp.ne.s32.totalorder %s185, %s186
    %p197 = scmp.eq.s32.totalorder %s16, 0
    %p198 = por %p196, %p197
    %p199 = scmp.ne.s32.totalorder %s185, %s186
    %p200 = scmp.eq.s32.totalorder %s17, 1
    %p201 = por %p199, %p200
    %p203 = scmp.ne.s32.totalorder %s186, %s202
    %p204 = scmp.eq.s32.totalorder %s17, 0
    %p205 = por %p203, %p204
    %p206 = scmp.le.s32.totalorder 1, %s11
    %p207 = scmp.lt.s32.totalorder %s11, 3
    %p208 = pnand %p206, %p207
    %p209 = pneg %p208
    // Predicated region
    $region9: #{_conv_downsample.1} parent=5 // pred_check
      _
    $region10: #{_conv_downsample.1} parent=5 // pred_check_branch
      %211 = sbr.rel (%p208) target = $region12
    $region11: #{_conv_downsample.1} parent=5 // pred_region
      %s212 = ssub.s32 %s11, 1
      // Predicated region
      $region13: #{_conv_downsample.1} parent=11 // pred_check
        %p213 = pneg %p116
      $region14: #{_conv_downsample.1} parent=11 // pred_check_branch
        %215 = sbr.rel (%p213) target = $region16
      $region15: #{_conv_downsample.1} parent=11 // pred_region
        %p216 = scmp.lt.s32.totalorder %s23, 0
        %s217 = scalar_select %p216, %s23, 0
        %s218 = smul.addr %s217, 8
        %s219 = scalar_lea.vmem %s2, %s218
      $region16: #{_conv_downsample.1} parent=11 // pred_fallthru
        _
      // Predicated region
      $region17: #{_conv_downsample.1} parent=11 // pred_check
        %p220 = pneg %p142
      $region18: #{_conv_downsample.1} parent=11 // pred_check_branch
        %222 = sbr.rel (%p220) target = $region20
      $region19: #{_conv_downsample.1} parent=11 // pred_region
        %p223 = scmp.lt.s32.totalorder %s23, 0
        %s224 = scalar_select %p223, %s23, 0
        %s225 = smul.addr %s224, 4
        %s226 = scalar_lea.vmem %s3, %s225
      $region20: #{_conv_downsample.1} parent=11 // pred_fallthru
        _
      // Predicated region
      $region21: #{_conv_downsample.1} parent=11 // pred_check
        %p227 = pneg %p168
      $region22: #{_conv_downsample.1} parent=11 // pred_check_branch
        %229 = sbr.rel (%p227) target = $region24
      $region23: #{_conv_downsample.1} parent=11 // pred_region
        %p230 = scmp.lt.s32.totalorder %s23, 0
        %s231 = scalar_select %p230, %s23, 0
        %s232 = scalar_lea.vmem %s4, %s231
      $region24: #{_conv_downsample.1} parent=11 // pred_fallthru
        _
    $region12: #{_conv_downsample.1} parent=5 // pred_fallthru
      _
    %p233 = scmp.lt.s32.totalorder %s11, 2
    // Predicated region
    $region25: #{_conv_downsample.1} parent=5 // pred_check
      %p234 = pneg %p233
    $region26: #{_conv_downsample.1} parent=5 // pred_check_branch
      %236 = sbr.rel (%p234) target = $region28
    $region27: #{_conv_downsample.1} parent=5 // pred_region
      // Predicated region
      $region29: #{_conv_downsample.1} parent=27 // pred_check
        %p237 = pneg %p52
      $region30: #{_conv_downsample.1} parent=27 // pred_check_branch
        %239 = sbr.rel (%p237) target = $region32
      $region31: #{_conv_downsample.1} parent=27 // pred_region
        %s240 = smul.u32 8, %s19
        %s241 = ssub.s32 9, %s240
        %p242 = scmp.lt.s32.totalorder %s241, 8
        %s243 = scalar_select %p242, %s241, 8
        %s244 = smul.u32 128, %s243
        %s245 = smul.u32 %s244, 2
        %s246 = smul.u32 %s245, 2
        %p247 = scmp.lt.s32.totalorder %s18, 1
        %s248 = scalar_select %p247, %s18, 1
        %p249 = scmp.lt.s32.totalorder %s240, 8
        %s250 = scalar_select %p249, %s240, 8
        %s251 = smul.addr %s250, 4
        %s252 = smul.addr %s248, 36
        %s253 = sadd.s32 %s251, %s252
        %s254 = smul.addr %s253, 8
        %s255 = scalar_lea.vmem %s0, %s254
        %s256 = smul.u32 8, %s19
        %s257 = ssub.s32 9, %s256
        %p258 = scmp.lt.s32.totalorder %s257, 8
        %s259 = scalar_select %p258, %s257, 8
        %s260 = smul.u32 128, %s259
        %s261 = smul.u32 %s260, 2
        %s262 = smul.u32 %s261, 2
      $region32: #{_conv_downsample.1} parent=27 // pred_fallthru
        _
      // Predicated region
      $region33: #{_conv_downsample.1} parent=27 // pred_check
        %p263 = pneg %p84
      $region34: #{_conv_downsample.1} parent=27 // pred_check_branch
        %265 = sbr.rel (%p263) target = $region36
      $region35: #{_conv_downsample.1} parent=27 // pred_region
        %s266 = sadd.s32 %s19, 1
        %s267 = smul.u32 %s266, 8
        %p268 = scmp.lt.s32.totalorder %s18, 1
        %s269 = scalar_select %p268, %s18, 1
        %p270 = scmp.lt.s32.totalorder %s267, 8
        %s271 = scalar_select %p270, %s267, 8
        %s272 = smul.addr %s271, 4
        %s273 = smul.addr %s269, 36
        %s274 = sadd.s32 %s272, %s273
        %s275 = smul.addr %s274, 8
        %s276 = scalar_lea.vmem %s1, %s275
        %s277 = sadd.s32 %s19, 1
        %s278 = smul.u32 %s277, 8
      $region36: #{_conv_downsample.1} parent=27 // pred_fallthru
        _
    $region28: #{_conv_downsample.1} parent=5 // pred_fallthru
      _
    %p279 = scmp.le.s32.totalorder 1, %s11
    %p280 = scmp.lt.s32.totalorder %s11, 3
    %p281 = pnand %p279, %p280
    %p282 = pneg %p281
    // Predicated region
    $region37: #{_conv_downsample.1} parent=5 // pred_check
      _
    $region38: #{_conv_downsample.1} parent=5 // pred_check_branch
      %284 = sbr.rel (%p281) target = $region40
    $region39: #{_conv_downsample.1} parent=5 // pred_region
      %s285 = ssub.s32 %s11, 1
      %s286 = smul.u32 8, %s22
      %s287 = ssub.s32 9, %s286
      %p288 = scmp.lt.s32.totalorder %s287, 8
      %s289 = scalar_select %p288, %s287, 8
      %s290 = smul.u32 128, %s289
      %s291 = smul.u32 %s290, 2
      %s292 = smul.u32 %s291, 2
      %p293 = scmp.lt.s32.totalorder %s21, 1
      %s294 = scalar_select %p293, %s21, 1
      %p295 = scmp.lt.s32.totalorder %s286, 8
      %s296 = scalar_select %p295, %s286, 8
      %s297 = smul.addr %s296, 4
      %s298 = smul.addr %s294, 36
      %s299 = sadd.s32 %s297, %s298
      %s300 = smul.addr %s299, 8
      %s301 = scalar_lea.vmem %s0, %s300
      %p302 = pneg %p58
      %p303 = pneg %p55
      %s304 = sadd.s32 %s22, 1
      %s305 = smul.u32 %s304, 8
      %p306 = scmp.lt.s32.totalorder %s21, 1
      %s307 = scalar_select %p306, %s21, 1
      %p308 = scmp.lt.s32.totalorder %s305, 8
      %s309 = scalar_select %p308, %s305, 8
      %s310 = smul.addr %s309, 4
      %s311 = smul.addr %s307, 36
      %s312 = sadd.s32 %s310, %s311
      %s313 = smul.addr %s312, 8
      %s314 = scalar_lea.vmem %s1, %s313
      %p315 = pneg %p90
      %p316 = pneg %p87
      %p317 = scmp.lt.s32.totalorder %s23, 0
      %s318 = scalar_select %p317, %s23, 0
      %s319 = smul.addr %s318, 8
      %s320 = scalar_lea.vmem %s2, %s319
      %p321 = pneg %p116
      %p322 = pneg %p113
      %p323 = scmp.lt.s32.totalorder %s23, 0
      %s324 = scalar_select %p323, %s23, 0
      %s325 = smul.addr %s324, 4
      %s326 = scalar_lea.vmem %s3, %s325
      %p327 = pneg %p142
      %p328 = pneg %p139
      %p329 = scmp.lt.s32.totalorder %s23, 0
      %s330 = scalar_select %p329, %s23, 0
      %s331 = scalar_lea.vmem %s4, %s330
      %p332 = pneg %p168
      %p333 = pneg %p165
      %p334 = pneg %p198
      %p335 = pneg %p195
      %s336 = smul.u32 16, %s22
      %p337 = scmp.lt.s32.totalorder %s21, 1
      %s338 = scalar_select %p337, %s21, 1
      %p339 = scmp.lt.s32.totalorder %s336, 15
      %s340 = scalar_select %p339, %s336, 15
      %p341 = scmp.lt.s32.totalorder %s23, 0
      %s342 = scalar_select %p341, %s23, 0
      %s343 = sadd.s32 %s342, %s340
      %s344 = smul.addr %s338, 16
      %s345 = sadd.s32 %s343, %s344
      %s346 = smul.addr %s345, 8
      %s347 = scalar_lea.vmem %s5, %s346
      %s348 = smul.u32 8, %s22
      %s349 = ssub.s32 9, %s348
      %p350 = scmp.lt.s32.totalorder %s349, 8
      %s351 = scalar_select %p350, %s349, 8
      %s352 = smul.u32 128, %s351
      %s353 = smul.u32 %s352, 2
      %s354 = smul.u32 %s353, 2
      %p355 = scmp.lt.s32.totalorder %s21, 1
      %s356 = scalar_select %p355, %s21, 1
      %p357 = scmp.lt.s32.totalorder %s348, 8
      %s358 = scalar_select %p357, %s348, 8
      %s359 = smul.addr %s358, 4
      %s360 = smul.addr %s356, 36
      %s361 = sadd.s32 %s359, %s360
      %s362 = smul.addr %s361, 8
      %s363 = scalar_lea.vmem %s0, %s362
      %s364 = smul.u32 8, %s22
      %s365 = ssub.s32 9, %s364
      %p366 = scmp.lt.s32.totalorder %s365, 8
      %s367 = scalar_select %p366, %s365, 8
      %s368 = smul.u32 128, %s367
      %s369 = smul.u32 %s368, 2
      %s370 = smul.u32 %s369, 2
      %s371 = sadd.s32 %s22, 1
      %s372 = smul.u32 %s371, 8
      %p373 = scmp.lt.s32.totalorder %s21, 1
      %s374 = scalar_select %p373, %s21, 1
      %p375 = scmp.lt.s32.totalorder %s372, 8
      %s376 = scalar_select %p375, %s372, 8
      %s377 = smul.addr %s376, 4
      %s378 = smul.addr %s374, 36
      %s379 = sadd.s32 %s377, %s378
      %s380 = smul.addr %s379, 8
      %s381 = scalar_lea.vmem %s1, %s380
      %s382 = sadd.s32 %s22, 1
      %s383 = smul.u32 %s382, 8
      %p384 = scmp.lt.s32.totalorder %s23, 0
      %s385 = scalar_select %p384, %s23, 0
      %s386 = smul.addr %s385, 8
      %s387 = scalar_lea.vmem %s2, %s386
      %p388 = scmp.lt.s32.totalorder %s23, 0
      %s389 = scalar_select %p388, %s23, 0
      %s390 = smul.addr %s389, 4
      %s391 = scalar_lea.vmem %s3, %s390
      %p392 = scmp.lt.s32.totalorder %s23, 0
      %s393 = scalar_select %p392, %s23, 0
      %s394 = scalar_lea.vmem %s4, %s393
      %s395 = smul.u32 16, %s22
      %p396 = scmp.lt.s32.totalorder %s21, 1
      %s397 = scalar_select %p396, %s21, 1
      %p398 = scmp.lt.s32.totalorder %s395, 15
      %s399 = scalar_select %p398, %s395, 15
      %p400 = scmp.lt.s32.totalorder %s23, 0
      %s401 = scalar_select %p400, %s23, 0
      %s402 = sadd.s32 %s401, %s399
      %s403 = smul.addr %s397, 16
      %s404 = sadd.s32 %s402, %s403
      %s405 = smul.addr %s404, 8
      %s406 = scalar_lea.vmem %s5, %s405
      %s407 = smul.u32 16, %s22
      %v408 = vld [vmem:[%s363] sm:$0xff]
      %v409 = vld [vmem:[%s363 + $0x8] sm:$0xff]
      %v410 = vld [vmem:[%s363 + $0x20] sm:$0xff]
      %v411 = vld [vmem:[%s363 + $0x28] sm:$0xff]
      %v412 = vld [vmem:[%s363 + $0x40] sm:$0xff]
      %v413 = vld [vmem:[%s363 + $0x48] sm:$0xff]
      %v414 = vld [vmem:[%s363 + $0x60] sm:$0xff]
      %v415 = vld [vmem:[%s363 + $0x68] sm:$0xff]
      %v416 = vld [vmem:[%s363 + $0x80] sm:$0xff]
      %v417 = vld [vmem:[%s363 + $0x88] sm:$0xff]
      %v418 = vld [vmem:[%s363 + $0xa0] sm:$0xff]
      %v419 = vld [vmem:[%s363 + $0xa8] sm:$0xff]
      %v420 = vld [vmem:[%s363 + $0xc0] sm:$0xff]
      %v421 = vld [vmem:[%s363 + $0xc8] sm:$0xff]
      %v422 = vld [vmem:[%s363 + $0xe0] sm:$0xff]
      %v423 = vld [vmem:[%s363 + $0xe8] sm:$0xff]
      %v424 = vrot.slane %v408, 1
      %v425 = vrot.slane %v409, 1
      %v426 = vrot.slane %v410, 1
      %v427 = vrot.slane %v411, 1
      %v428 = vrot.slane %v412, 1
      %v429 = vrot.slane %v413, 1
      %v430 = vrot.slane %v414, 1
      %v431 = vrot.slane %v415, 1
      %v432 = vrot.slane %v416, 1
      %v433 = vrot.slane %v417, 1
      %v434 = vrot.slane %v418, 1
      %v435 = vrot.slane %v419, 1
      %v436 = vrot.slane %v420, 1
      %v437 = vrot.slane %v421, 1
      %v438 = vrot.slane %v422, 1
      %v439 = vrot.slane %v423, 1
      %v440 = vlaneseq
      %v441 = vshrl.u32 %v440, 7
      %vm442 = vcmp.lt.s32.totalorder %v441, 7
      %v443 = vsel %vm442, %v438, %v439
      %v444 = vsel %vm442, %v437, %v438
      %v445 = vsel %vm442, %v436, %v437
      %v446 = vsel %vm442, %v435, %v436
      %v447 = vsel %vm442, %v434, %v435
      %v448 = vsel %vm442, %v433, %v434
      %v449 = vsel %vm442, %v432, %v433
      %v450 = vsel %vm442, %v431, %v432
      %v451 = vsel %vm442, %v430, %v431
      %v452 = vsel %vm442, %v429, %v430
      %v453 = vsel %vm442, %v428, %v429
      %v454 = vsel %vm442, %v427, %v428
      %v455 = vsel %vm442, %v426, %v427
      %v456 = vsel %vm442, %v425, %v426
      %v457 = vsel %vm442, %v424, %v425
      %v458 = vsel %vm442, %v439, %v424
      %v459 = vld [vmem:[%s387] sm:$0xff]
      %vm460 = vcmask 64512
      %v462 = vsel %vm460, %v408, 0
      %v465 = vsel %vm460, %v409, 0
      %v468 = vsel %vm460, %v410, 0
      %v471 = vsel %vm460, %v411, 0
      %v474 = vsel %vm460, %v412, 0
      %v477 = vsel %vm460, %v413, 0
      %v480 = vsel %vm460, %v414, 0
      %v483 = vsel %vm460, %v415, 0
      %v486 = vsel %vm460, %v416, 0
      %v489 = vsel %vm460, %v417, 0
      %v492 = vsel %vm460, %v418, 0
      %v495 = vsel %vm460, %v419, 0
      %v498 = vsel %vm460, %v420, 0
      %v501 = vsel %vm460, %v421, 0
      %v504 = vsel %vm460, %v422, 0
      %v507 = vsel %vm460, %v423, 0
      %509 = vmatprep.subr.mxu0 0.0
      %510 = vmatpush1.msra.mxu0 %v459
      %511 = vmatprep.subr.mxu0 0.0
      %512 = vmatpush1.msra.mxu0 0.0
      %513 = vmatprep.subr.mxu0 0.0
      %514 = vmatpush1.msra.mxu0 0.0
      %515 = vmatprep.subr.mxu0 0.0
      %516 = vmatpush1.msra.mxu0 0.0
      %517 = vmatprep.subr.mxu0 0.0
      %518 = vmatpush1.msra.mxu0 0.0
      %519 = vmatprep.subr.mxu0 0.0
      %520 = vmatpush1.msra.mxu0 0.0
      %521 = vmatprep.subr.mxu0 0.0
      %522 = vmatpush1.msra.mxu0 0.0
      %523 = vmatprep.subr.mxu0 0.0
      %524 = vmatpush1.msra.mxu0 0.0
      %525 = vmatprep.subr.mxu0 0.0
      %526 = vmatpush1.msra.mxu0 0.0
      %527 = vmatprep.subr.mxu0 0.0
      %528 = vmatpush1.msra.mxu0 0.0
      %529 = vmatprep.subr.mxu0 0.0
      %530 = vmatpush1.msra.mxu0 0.0
      %531 = vmatprep.subr.mxu0 0.0
      %532 = vmatpush1.msra.mxu0 0.0
      %533 = vmatprep.subr.mxu0 0.0
      %534 = vmatpush1.msra.mxu0 0.0
      %535 = vmatprep.subr.mxu0 0.0
      %536 = vmatpush1.msra.mxu0 0.0
      %537 = vmatprep.subr.mxu0 0.0
      %538 = vmatpush1.msra.mxu0 0.0
      %539 = vmatprep.subr.mxu0 0.0
      %540 = vmatpush1.msra.mxu0 0.0
      %541 = vmatprep.subr.mxu0 0.0
      %542 = vmatpush1.msra.mxu0 0.0
      %543 = vmatprep.subr.mxu0 0.0
      %544 = vmatpush1.msra.mxu0 0.0
      %545 = vmatprep.subr.mxu0 0.0
      %546 = vmatpush1.msra.mxu0 0.0
      %547 = vmatprep.subr.mxu0 0.0
      %548 = vmatpush1.msra.mxu0 0.0
      %549 = vmatprep.subr.mxu0 0.0
      %550 = vmatpush1.msra.mxu0 0.0
      %551 = vmatprep.subr.mxu0 0.0
      %552 = vmatpush1.msra.mxu0 0.0
      %553 = vmatprep.subr.mxu0 0.0
      %554 = vmatpush1.msra.mxu0 0.0
      %555 = vmatprep.subr.mxu0 0.0
      %556 = vmatpush1.msra.mxu0 0.0
      %557 = vmatprep.subr.mxu0 0.0
      %558 = vmatpush1.msra.mxu0 0.0
      %559 = vmatprep.subr.mxu0 0.0
      %560 = vmatpush1.msra.mxu0 0.0
      %561 = vmatprep.subr.mxu0 0.0
      %562 = vmatpush1.msra.mxu0 0.0
      %563 = vmatprep.subr.mxu0 0.0
      %564 = vmatpush1.msra.mxu0 0.0
      %565 = vmatprep.subr.mxu0 0.0
      %566 = vmatpush1.msra.mxu0 0.0
      %567 = vmatprep.subr.mxu0 0.0
      %568 = vmatpush1.msra.mxu0 0.0
      %569 = vmatprep.subr.mxu0 0.0
      %570 = vmatpush1.msra.mxu0 0.0
      %571 = vmatprep.subr.mxu0 0.0
      %572 = vmatpush1.msra.mxu0 0.0
      %573 = vmatprep.mubr.f32.mxu0 0.0
      %574 = vmatmul.mubr.f32.gmra.mrb[0].mxu0 %v462
      %v575 = vpop.f32.mrb[0].mxu0
      %v576 = vadd.f32 0.0, %v575
      %v577 = vpop.f32.mrb[0].mxu0
      %578 = vmatprep.mubr.f32.mxu0 0.0
      %579 = vmatmul.mubr.f32.gmra.mrb[0].mxu0 %v465
      %v580 = vpop.f32.mrb[0].mxu0
      %v581 = vadd.f32 0.0, %v580
      %v582 = vpop.f32.mrb[0].mxu0
      %583 = vmatprep.mubr.f32.mxu0 0.0
      %584 = vmatmul.mubr.f32.gmra.mrb[0].mxu0 %v468
      %v585 = vpop.f32.mrb[0].mxu0
      %v586 = vadd.f32 0.0, %v585
      %v587 = vpop.f32.mrb[0].mxu0
      %588 = vmatprep.mubr.f32.mxu0 0.0
      %589 = vmatmul.mubr.f32.gmra.mrb[0].mxu0 %v471
      %v590 = vpop.f32.mrb[0].mxu0
      %v591 = vadd.f32 0.0, %v590
      %v592 = vpop.f32.mrb[0].mxu0
      %593 = vmatprep.mubr.f32.mxu0 0.0
      %594 = vmatmul.mubr.f32.gmra.mrb[0].mxu0 %v474
      %v595 = vpop.f32.mrb[0].mxu0
      %v596 = vadd.f32 0.0, %v595
      %v597 = vpop.f32.mrb[0].mxu0
      %598 = vmatprep.mubr.f32.mxu0 0.0
      %599 = vmatmul.mubr.f32.gmra.mrb[0].mxu0 %v477
      %v600 = vpop.f32.mrb[0].mxu0
      %v601 = vadd.f32 0.0, %v600
      %v602 = vpop.f32.mrb[0].mxu0
      %603 = vmatprep.mubr.f32.mxu0 0.0
      %604 = vmatmul.mubr.f32.gmra.mrb[0].mxu0 %v480
      %v605 = vpop.f32.mrb[0].mxu0
      %v606 = vadd.f32 0.0, %v605
      %v607 = vpop.f32.mrb[0].mxu0
      %608 = vmatprep.mubr.f32.mxu0 0.0
      %609 = vmatmul.mubr.f32.gmra.mrb[0].mxu0 %v483
      %v610 = vpop.f32.mrb[0].mxu0
      %v611 = vadd.f32 0.0, %v610
      %v612 = vpop.f32.mrb[0].mxu0
      %613 = vmatprep.mubr.f32.mxu0 0.0
      %614 = vmatmul.mubr.f32.gmra.mrb[0].mxu0 %v486
      %v615 = vpop.f32.mrb[0].mxu0
      %v616 = vadd.f32 0.0, %v615
      %v617 = vpop.f32.mrb[0].mxu0
      %618 = vmatprep.mubr.f32.mxu0 0.0
      %619 = vmatmul.mubr.f32.gmra.mrb[0].mxu0 %v489
      %v620 = vpop.f32.mrb[0].mxu0
      %v621 = vadd.f32 0.0, %v620
      %v622 = vpop.f32.mrb[0].mxu0
      %623 = vmatprep.mubr.f32.mxu0 0.0
      %624 = vmatmul.mubr.f32.gmra.mrb[0].mxu0 %v492
      %v625 = vpop.f32.mrb[0].mxu0
      %v626 = vadd.f32 0.0, %v625
      %v627 = vpop.f32.mrb[0].mxu0
      %628 = vmatprep.mubr.f32.mxu0 0.0
      %629 = vmatmul.mubr.f32.gmra.mrb[0].mxu0 %v495
      %v630 = vpop.f32.mrb[0].mxu0
      %v631 = vadd.f32 0.0, %v630
      %v632 = vpop.f32.mrb[0].mxu0
      %633 = vmatprep.mubr.f32.mxu0 0.0
      %634 = vmatmul.mubr.f32.gmra.mrb[0].mxu0 %v498
      %v635 = vpop.f32.mrb[0].mxu0
      %v636 = vadd.f32 0.0, %v635
      %v637 = vpop.f32.mrb[0].mxu0
      %638 = vmatprep.mubr.f32.mxu0 0.0
      %639 = vmatmul.mubr.f32.gmra.mrb[0].mxu0 %v501
      %v640 = vpop.f32.mrb[0].mxu0
      %v641 = vadd.f32 0.0, %v640
      %v642 = vpop.f32.mrb[0].mxu0
      %643 = vmatprep.mubr.f32.mxu0 0.0
      %644 = vmatmul.mubr.f32.gmra.mrb[0].mxu0 %v504
      %v645 = vpop.f32.mrb[0].mxu0
      %v646 = vadd.f32 0.0, %v645
      %v647 = vpop.f32.mrb[0].mxu0
      %648 = vmatprep.mubr.f32.mxu0 0.0
      %649 = vmatmul.mubr.f32.gmra.mrb[0].mxu0 %v507
      %v650 = vpop.f32.mrb[0].mxu0
      %v651 = vadd.f32 0.0, %v650
      %v652 = vpop.f32.mrb[0].mxu0
      %653 = vdwg.mxu0
      %654 = vst [vmem:[#allocation2] sm:$0xff] %v576
      %655 = vst [vmem:[#allocation2 + $0x8] sm:$0xff] %v581
      %656 = vst [vmem:[#allocation2 + $0x10] sm:$0xff] %v586
      %657 = vst [vmem:[#allocation2 + $0x18] sm:$0xff] %v591
      %658 = vst [vmem:[#allocation2 + $0x20] sm:$0xff] %v596
      %659 = vst [vmem:[#allocation2 + $0x28] sm:$0xff] %v601
      %660 = vst [vmem:[#allocation2 + $0x30] sm:$0xff] %v606
      %661 = vst [vmem:[#allocation2 + $0x38] sm:$0xff] %v611
      %662 = vst [vmem:[#allocation2 + $0x40] sm:$0xff] %v616
      %663 = vst [vmem:[#allocation2 + $0x48] sm:$0xff] %v621
      %664 = vst [vmem:[#allocation2 + $0x50] sm:$0xff] %v626
      %665 = vst [vmem:[#allocation2 + $0x58] sm:$0xff] %v631
      %666 = vst [vmem:[#allocation2 + $0x60] sm:$0xff] %v636
      %667 = vst [vmem:[#allocation2 + $0x68] sm:$0xff] %v641
      %668 = vst [vmem:[#allocation2 + $0x70] sm:$0xff] %v646
      %669 = vst [vmem:[#allocation2 + $0x78] sm:$0xff] %v651
      %v670 = vld [vmem:[#allocation2] sm:$0xff]
      %v671 = vld [vmem:[#allocation2 + $0x8] sm:$0xff]
      %v672 = vld [vmem:[#allocation2 + $0x10] sm:$0xff]
      %v673 = vld [vmem:[#allocation2 + $0x18] sm:$0xff]
      %v674 = vld [vmem:[#allocation2 + $0x20] sm:$0xff]
      %v675 = vld [vmem:[#allocation2 + $0x28] sm:$0xff]
      %v676 = vld [vmem:[#allocation2 + $0x30] sm:$0xff]
      %v677 = vld [vmem:[#allocation2 + $0x38] sm:$0xff]
      %v678 = vld [vmem:[#allocation2 + $0x40] sm:$0xff]
      %v679 = vld [vmem:[#allocation2 + $0x48] sm:$0xff]
      %v680 = vld [vmem:[#allocation2 + $0x50] sm:$0xff]
      %v681 = vld [vmem:[#allocation2 + $0x58] sm:$0xff]
      %v682 = vld [vmem:[#allocation2 + $0x60] sm:$0xff]
      %v683 = vld [vmem:[#allocation2 + $0x68] sm:$0xff]
      %v684 = vld [vmem:[#allocation2 + $0x70] sm:$0xff]
      %v685 = vld [vmem:[#allocation2 + $0x78] sm:$0xff]
      %v686 = vld [vmem:[%s391] sm:$0xf]
      %vm687 = vcmask 31744
      %v689 = vsel %vm687, %v457, 0
      %v692 = vsel %vm687, %v456, 0
      %v695 = vsel %vm687, %v455, 0
      %v698 = vsel %vm687, %v454, 0
      %v701 = vsel %vm687, %v453, 0
      %v704 = vsel %vm687, %v452, 0
      %v707 = vsel %vm687, %v451, 0
      %v710 = vsel %vm687, %v450, 0
      %v713 = vsel %vm687, %v449, 0
      %v716 = vsel %vm687, %v448, 0
      %v719 = vsel %vm687, %v447, 0
      %v722 = vsel %vm687, %v446, 0
      %v725 = vsel %vm687, %v445, 0
      %v728 = vsel %vm687, %v444, 0
      %v731 = vsel %vm687, %v443, 0
      %v734 = vsel %vm687, %v458, 0
      %vm736 = vcmask 1043456
      %v738 = vsel %vm736, %v686, 0
      %740 = vmatprep.subr.mxu0 0.0
      %741 = vmatpush1.msra.mxu0 %v738
      %742 = vmatprep.subr.mxu0 0.0
      %743 = vmatpush1.msra.mxu0 0.0
      %744 = vmatprep.subr.mxu0 0.0
      %745 = vmatpush1.msra.mxu0 0.0
      %746 = vmatprep.subr.mxu0 0.0
      %747 = vmatpush1.msra.mxu0 0.0
      %748 = vmatprep.subr.mxu0 0.0
      %749 = vmatpush1.msra.mxu0 0.0
      %750 = vmatprep.subr.mxu0 0.0
      %751 = vmatpush1.msra.mxu0 0.0
      %752 = vmatprep.subr.mxu0 0.0
      %753 = vmatpush1.msra.mxu0 0.0
      %754 = vmatprep.subr.mxu0 0.0
      %755 = vmatpush1.msra.mxu0 0.0
      %756 = vmatprep.subr.mxu0 0.0
      %757 = vmatpush1.msra.mxu0 0.0
      %758 = vmatprep.subr.mxu0 0.0
      %759 = vmatpush1.msra.mxu0 0.0
      %760 = vmatprep.subr.mxu0 0.0
      %761 = vmatpush1.msra.mxu0 0.0
      %762 = vmatprep.subr.mxu0 0.0
      %763 = vmatpush1.msra.mxu0 0.0
      %764 = vmatprep.subr.mxu0 0.0
      %765 = vmatpush1.msra.mxu0 0.0
      %766 = vmatprep.subr.mxu0 0.0
      %767 = vmatpush1.msra.mxu0 0.0
      %768 = vmatprep.subr.mxu0 0.0
      %769 = vmatpush1.msra.mxu0 0.0
      %770 = vmatprep.subr.mxu0 0.0
      %771 = vmatpush1.msra.mxu0 0.0
      %772 = vmatprep.subr.mxu0 0.0
      %773 = vmatpush1.msra.mxu0 0.0
      %774 = vmatprep.subr.mxu0 0.0
      %775 = vmatpush1.msra.mxu0 0.0
      %776 = vmatprep.subr.mxu0 0.0
      %777 = vmatpush1.msra.mxu0 0.0
      %778 = vmatprep.subr.mxu0 0.0
      %779 = vmatpush1.msra.mxu0 0.0
      %780 = vmatprep.subr.mxu0 0.0
      %781 = vmatpush1.msra.mxu0 0.0
      %782 = vmatprep.subr.mxu0 0.0
      %783 = vmatpush1.msra.mxu0 0.0
      %784 = vmatprep.subr.mxu0 0.0
      %785 = vmatpush1.msra.mxu0 0.0
      %786 = vmatprep.subr.mxu0 0.0
      %787 = vmatpush1.msra.mxu0 0.0
      %788 = vmatprep.subr.mxu0 0.0
      %789 = vmatpush1.msra.mxu0 0.0
      %790 = vmatprep.subr.mxu0 0.0
      %791 = vmatpush1.msra.mxu0 0.0
      %792 = vmatprep.subr.mxu0 0.0
      %793 = vmatpush1.msra.mxu0 0.0
      %794 = vmatprep.subr.mxu0 0.0
      %795 = vmatpush1.msra.mxu0 0.0
      %796 = vmatprep.subr.mxu0 0.0
      %797 = vmatpush1.msra.mxu0 0.0
      %798 = vmatprep.subr.mxu0 0.0
      %799 = vmatpush1.msra.mxu0 0.0
      %800 = vmatprep.subr.mxu0 0.0
      %801 = vmatpush1.msra.mxu0 0.0
      %802 = vmatprep.subr.mxu0 0.0
      %803 = vmatpush1.msra.mxu0 0.0
      %804 = vmatprep.mubr.f32.mxu0 0.0
      %805 = vmatmul.mubr.f32.gmra.mrb[0].mxu0 %v689
      %v806 = vpop.f32.mrb[0].mxu0
      %v807 = vadd.f32 0.0, %v806
      %v808 = vpop.f32.mrb[0].mxu0
      %809 = vmatprep.mubr.f32.mxu0 0.0
      %810 = vmatmul.mubr.f32.gmra.mrb[0].mxu0 %v692
      %v811 = vpop.f32.mrb[0].mxu0
      %v812 = vadd.f32 0.0, %v811
      %v813 = vpop.f32.mrb[0].mxu0
      %814 = vmatprep.mubr.f32.mxu0 0.0
      %815 = vmatmul.mubr.f32.gmra.mrb[0].mxu0 %v695
      %v816 = vpop.f32.mrb[0].mxu0
      %v817 = vadd.f32 0.0, %v816
      %v818 = vpop.f32.mrb[0].mxu0
      %819 = vmatprep.mubr.f32.mxu0 0.0
      %820 = vmatmul.mubr.f32.gmra.mrb[0].mxu0 %v698
      %v821 = vpop.f32.mrb[0].mxu0
      %v822 = vadd.f32 0.0, %v821
      %v823 = vpop.f32.mrb[0].mxu0
      %824 = vmatprep.mubr.f32.mxu0 0.0
      %825 = vmatmul.mubr.f32.gmra.mrb[0].mxu0 %v701
      %v826 = vpop.f32.mrb[0].mxu0
      %v827 = vadd.f32 0.0, %v826
      %v828 = vpop.f32.mrb[0].mxu0
      %829 = vmatprep.mubr.f32.mxu0 0.0
      %830 = vmatmul.mubr.f32.gmra.mrb[0].mxu0 %v704
      %v831 = vpop.f32.mrb[0].mxu0
      %v832 = vadd.f32 0.0, %v831
      %v833 = vpop.f32.mrb[0].mxu0
      %834 = vmatprep.mubr.f32.mxu0 0.0
      %835 = vmatmul.mubr.f32.gmra.mrb[0].mxu0 %v707
      %v836 = vpop.f32.mrb[0].mxu0
      %v837 = vadd.f32 0.0, %v836
      %v838 = vpop.f32.mrb[0].mxu0
      %839 = vmatprep.mubr.f32.mxu0 0.0
      %840 = vmatmul.mubr.f32.gmra.mrb[0].mxu0 %v710
      %v841 = vpop.f32.mrb[0].mxu0
      %v842 = vadd.f32 0.0, %v841
      %v843 = vpop.f32.mrb[0].mxu0
      %844 = vmatprep.mubr.f32.mxu0 0.0
      %845 = vmatmul.mubr.f32.gmra.mrb[0].mxu0 %v713
      %v846 = vpop.f32.mrb[0].mxu0
      %v847 = vadd.f32 0.0, %v846
      %v848 = vpop.f32.mrb[0].mxu0
      %849 = vmatprep.mubr.f32.mxu0 0.0
      %850 = vmatmul.mubr.f32.gmra.mrb[0].mxu0 %v716
      %v851 = vpop.f32.mrb[0].mxu0
      %v852 = vadd.f32 0.0, %v851
      %v853 = vpop.f32.mrb[0].mxu0
      %854 = vmatprep.mubr.f32.mxu0 0.0
      %855 = vmatmul.mubr.f32.gmra.mrb[0].mxu0 %v719
      %v856 = vpop.f32.mrb[0].mxu0
      %v857 = vadd.f32 0.0, %v856
      %v858 = vpop.f32.mrb[0].mxu0
      %859 = vmatprep.mubr.f32.mxu0 0.0
      %860 = vmatmul.mubr.f32.gmra.mrb[0].mxu0 %v722
      %v861 = vpop.f32.mrb[0].mxu0
      %v862 = vadd.f32 0.0, %v861
      %v863 = vpop.f32.mrb[0].mxu0
      %864 = vmatprep.mubr.f32.mxu0 0.0
      %865 = vmatmul.mubr.f32.gmra.mrb[0].mxu0 %v725
      %v866 = vpop.f32.mrb[0].mxu0
      %v867 = vadd.f32 0.0, %v866
      %v868 = vpop.f32.mrb[0].mxu0
      %869 = vmatprep.mubr.f32.mxu0 0.0
      %870 = vmatmul.mubr.f32.gmra.mrb[0].mxu0 %v728
      %v871 = vpop.f32.mrb[0].mxu0
      %v872 = vadd.f32 0.0, %v871
      %v873 = vpop.f32.mrb[0].mxu0
      %874 = vmatprep.mubr.f32.mxu0 0.0
      %875 = vmatmul.mubr.f32.gmra.mrb[0].mxu0 %v731
      %v876 = vpop.f32.mrb[0].mxu0
      %v877 = vadd.f32 0.0, %v876
      %v878 = vpop.f32.mrb[0].mxu0
      %879 = vmatprep.mubr.f32.mxu0 0.0
      %880 = vmatmul.mubr.f32.gmra.mrb[0].mxu0 %v734
      %v881 = vpop.f32.mrb[0].mxu0
      %v882 = vadd.f32 0.0, %v881
      %v883 = vpop.f32.mrb[0].mxu0
      %884 = vdwg.mxu0
      %v885 = vadd.f32 %v670, %v807
      %v886 = vadd.f32 %v671, %v812
      %v887 = vadd.f32 %v672, %v817
      %v888 = vadd.f32 %v673, %v822
      %v889 = vadd.f32 %v674, %v827
      %v890 = vadd.f32 %v675, %v832
      %v891 = vadd.f32 %v676, %v837
      %v892 = vadd.f32 %v677, %v842
      %v893 = vadd.f32 %v678, %v847
      %v894 = vadd.f32 %v679, %v852
      %v895 = vadd.f32 %v680, %v857
      %v896 = vadd.f32 %v681, %v862
      %v897 = vadd.f32 %v682, %v867
      %v898 = vadd.f32 %v683, %v872
      %v899 = vadd.f32 %v684, %v877
      %v900 = vadd.f32 %v685, %v882
      %901 = vst [vmem:[#allocation2] sm:$0xff] %v885
      %902 = vst [vmem:[#allocation2 + $0x8] sm:$0xff] %v886
      %903 = vst [vmem:[#allocation2 + $0x10] sm:$0xff] %v887
      %904 = vst [vmem:[#allocation2 + $0x18] sm:$0xff] %v888
      %905 = vst [vmem:[#allocation2 + $0x20] sm:$0xff] %v889
      %906 = vst [vmem:[#allocation2 + $0x28] sm:$0xff] %v890
      %907 = vst [vmem:[#allocation2 + $0x30] sm:$0xff] %v891
      %908 = vst [vmem:[#allocation2 + $0x38] sm:$0xff] %v892
      %909 = vst [vmem:[#allocation2 + $0x40] sm:$0xff] %v893
      %910 = vst [vmem:[#allocation2 + $0x48] sm:$0xff] %v894
      %911 = vst [vmem:[#allocation2 + $0x50] sm:$0xff] %v895
      %912 = vst [vmem:[#allocation2 + $0x58] sm:$0xff] %v896
      %913 = vst [vmem:[#allocation2 + $0x60] sm:$0xff] %v897
      %914 = vst [vmem:[#allocation2 + $0x68] sm:$0xff] %v898
      %915 = vst [vmem:[#allocation2 + $0x70] sm:$0xff] %v899
      %916 = vst [vmem:[#allocation2 + $0x78] sm:$0xff] %v900
      %s917 = scalar_lea.vmem %s363, 16
      %v918 = vld [vmem:[%s917] sm:$0xff]
      %v919 = vld [vmem:[%s917 + $0x8] sm:$0xff]
      %v920 = vld [vmem:[%s917 + $0x20] sm:$0xff]
      %v921 = vld [vmem:[%s917 + $0x28] sm:$0xff]
      %v922 = vld [vmem:[%s917 + $0x40] sm:$0xff]
      %v923 = vld [vmem:[%s917 + $0x48] sm:$0xff]
      %v924 = vld [vmem:[%s917 + $0x60] sm:$0xff]
      %v925 = vld [vmem:[%s917 + $0x68] sm:$0xff]
      %v926 = vld [vmem:[%s917 + $0x80] sm:$0xff]
      %v927 = vld [vmem:[%s917 + $0x88] sm:$0xff]
      %v928 = vld [vmem:[%s917 + $0xa0] sm:$0xff]
      %v929 = vld [vmem:[%s917 + $0xa8] sm:$0xff]
      %v930 = vld [vmem:[%s917 + $0xc0] sm:$0xff]
      %v931 = vld [vmem:[%s917 + $0xc8] sm:$0xff]
      %v932 = vld [vmem:[%s917 + $0xe0] sm:$0xff]
      %v933 = vld [vmem:[%s917 + $0xe8] sm:$0xff]
      %v934 = vrot.slane %v918, 1
      %v935 = vrot.slane %v919, 1
      %v936 = vrot.slane %v920, 1
      %v937 = vrot.slane %v921, 1
      %v938 = vrot.slane %v922, 1
      %v939 = vrot.slane %v923, 1
      %v940 = vrot.slane %v924, 1
      %v941 = vrot.slane %v925, 1
      %v942 = vrot.slane %v926, 1
      %v943 = vrot.slane %v927, 1
      %v944 = vrot.slane %v928, 1
      %v945 = vrot.slane %v929, 1
      %v946 = vrot.slane %v930, 1
      %v947 = vrot.slane %v931, 1
      %v948 = vrot.slane %v932, 1
      %v949 = vrot.slane %v933, 1
      %v950 = vsel %vm442, %v948, %v949
      %v951 = vsel %vm442, %v947, %v948
      %v952 = vsel %vm442, %v946, %v947
      %v953 = vsel %vm442, %v945, %v946
      %v954 = vsel %vm442, %v944, %v945
      %v955 = vsel %vm442, %v943, %v944
      %v956 = vsel %vm442, %v942, %v943
      %v957 = vsel %vm442, %v941, %v942
      %v958 = vsel %vm442, %v940, %v941
      %v959 = vsel %vm442, %v939, %v940
      %v960 = vsel %vm442, %v938, %v939
      %v961 = vsel %vm442, %v937, %v938
      %v962 = vsel %vm442, %v936, %v937
      %v963 = vsel %vm442, %v935, %v936
      %v964 = vsel %vm442, %v934, %v935
      %v965 = vsel %vm442, %v949, %v934
      %v966 = vld [vmem:[#allocation2] sm:$0xff]
      %v967 = vld [vmem:[#allocation2 + $0x8] sm:$0xff]
      %v968 = vld [vmem:[#allocation2 + $0x10] sm:$0xff]
      %v969 = vld [vmem:[#allocation2 + $0x18] sm:$0xff]
      %v970 = vld [vmem:[#allocation2 + $0x20] sm:$0xff]
      %v971 = vld [vmem:[#allocation2 + $0x28] sm:$0xff]
      %v972 = vld [vmem:[#allocation2 + $0x30] sm:$0xff]
      %v973 = vld [vmem:[#allocation2 + $0x38] sm:$0xff]
      %v974 = vld [vmem:[#allocation2 + $0x40] sm:$0xff]
      %v975 = vld [vmem:[#allocation2 + $0x48] sm:$0xff]
      %v976 = vld [vmem:[#allocation2 + $0x50] sm:$0xff]
      %v977 = vld [vmem:[#allocation2 + $0x58] sm:$0xff]
      %v978 = vld [vmem:[#allocation2 + $0x60] sm:$0xff]
      %v979 = vld [vmem:[#allocation2 + $0x68] sm:$0xff]
      %v980 = vld [vmem:[#allocation2 + $0x70] sm:$0xff]
      %v981 = vld [vmem:[#allocation2 + $0x78] sm:$0xff]
      %s982 = scalar_lea.vmem %s387, 8
      %v983 = vld [vmem:[%s982] sm:$0xff]
      %v985 = vsel %vm460, %v918, 0
      %v988 = vsel %vm460, %v919, 0
      %v991 = vsel %vm460, %v920, 0
      %v994 = vsel %vm460, %v921, 0
      %v997 = vsel %vm460, %v922, 0
      %v1000 = vsel %vm460, %v923, 0
      %v1003 = vsel %vm460, %v924, 0
      %v1006 = vsel %vm460, %v925, 0
      %v1009 = vsel %vm460, %v926, 0
      %v1012 = vsel %vm460, %v927, 0
      %v1015 = vsel %vm460, %v928, 0
      %v1018 = vsel %vm460, %v929, 0
      %v1021 = vsel %vm460, %v930, 0
      %v1024 = vsel %vm460, %v931, 0
      %v1027 = vsel %vm460, %v932, 0
      %v1030 = vsel %vm460, %v933, 0
      %1032 = vmatprep.subr.mxu0 0.0
      %1033 = vmatpush1.msra.mxu0 %v983
      %1034 = vmatprep.subr.mxu0 0.0
      %1035 = vmatpush1.msra.mxu0 0.0
      %1036 = vmatprep.subr.mxu0 0.0
      %1037 = vmatpush1.msra.mxu0 0.0
      %1038 = vmatprep.subr.mxu0 0.0
      %1039 = vmatpush1.msra.mxu0 0.0
      %1040 = vmatprep.subr.mxu0 0.0
      %1041 = vmatpush1.msra.mxu0 0.0
      %1042 = vmatprep.subr.mxu0 0.0
      %1043 = vmatpush1.msra.mxu0 0.0
      %1044 = vmatprep.subr.mxu0 0.0
      %1045 = vmatpush1.msra.mxu0 0.0
      %1046 = vmatprep.subr.mxu0 0.0
      %1047 = vmatpush1.msra.mxu0 0.0
      %1048 = vmatprep.subr.mxu0 0.0
      %1049 = vmatpush1.msra.mxu0 0.0
      %1050 = vmatprep.subr.mxu0 0.0
      %1051 = vmatpush1.msra.mxu0 0.0
      %1052 = vmatprep.subr.mxu0 0.0
      %1053 = vmatpush1.msra.mxu0 0.0
      %1054 = vmatprep.subr.mxu0 0.0
      %1055 = vmatpush1.msra.mxu0 0.0
      %1056 = vmatprep.subr.mxu0 0.0
      %1057 = vmatpush1.msra.mxu0 0.0
      %1058 = vmatprep.subr.mxu0 0.0
      %1059 = vmatpush1.msra.mxu0 0.0
      %1060 = vmatprep.subr.mxu0 0.0
      %1061 = vmatpush1.msra.mxu0 0.0
      %1062 = vmatprep.subr.mxu0 0.0
      %1063 = vmatpush1.msra.mxu0 0.0
      %1064 = vmatprep.subr.mxu0 0.0
      %1065 = vmatpush1.msra.mxu0 0.0
      %1066 = vmatprep.subr.mxu0 0.0
      %1067 = vmatpush1.msra.mxu0 0.0
      %1068 = vmatprep.subr.mxu0 0.0
      %1069 = vmatpush1.msra.mxu0 0.0
      %1070 = vmatprep.subr.mxu0 0.0
      %1071 = vmatpush1.msra.mxu0 0.0
      %1072 = vmatprep.subr.mxu0 0.0
      %1073 = vmatpush1.msra.mxu0 0.0
      %1074 = vmatprep.subr.mxu0 0.0
      %1075 = vmatpush1.msra.mxu0 0.0
      %1076 = vmatprep.subr.mxu0 0.0
      %1077 = vmatpush1.msra.mxu0 0.0
      %1078 = vmatprep.subr.mxu0 0.0
      %1079 = vmatpush1.msra.mxu0 0.0
      %1080 = vmatprep.subr.mxu0 0.0
      %1081 = vmatpush1.msra.mxu0 0.0
      %1082 = vmatprep.subr.mxu0 0.0
      %1083 = vmatpush1.msra.mxu0 0.0
      %1084 = vmatprep.subr.mxu0 0.0
      %1085 = vmatpush1.msra.mxu0 0.0
      %1086 = vmatprep.subr.mxu0 0.0
      %1087 = vmatpush1.msra.mxu0 0.0
      %1088 = vmatprep.subr.mxu0 0.0
      %1089 = vmatpush1.msra.mxu0 0.0
      %1090 = vmatprep.subr.mxu0 0.0
      %1091 = vmatpush1.msra.mxu0 0.0
      %1092 = vmatprep.subr.mxu0 0.0
      %1093 = vmatpush1.msra.mxu0 0.0
      %1094 = vmatprep.subr.mxu0 0.0
      %1095 = vmatpush1.msra.mxu0 0.0
      %1096 = vmatprep.mubr.f32.mxu0 0.0
      %1097 = vmatmul.mubr.f32.gmra.mrb[0].mxu0 %v985
      %v1098 = vpop.f32.mrb[0].mxu0
      %v1099 = vadd.f32 0.0, %v1098
      %v1100 = vpop.f32.mrb[0].mxu0
      %1101 = vmatprep.mubr.f32.mxu0 0.0
      %1102 = vmatmul.mubr.f32.gmra.mrb[0].mxu0 %v988
      %v1103 = vpop.f32.mrb[0].mxu0
      %v1104 = vadd.f32 0.0, %v1103
      %v1105 = vpop.f32.mrb[0].mxu0
      %1106 = vmatprep.mubr.f32.mxu0 0.0
      %1107 = vmatmul.mubr.f32.gmra.mrb[0].mxu0 %v991
      %v1108 = vpop.f32.mrb[0].mxu0
      %v1109 = vadd.f32 0.0, %v1108
      %v1110 = vpop.f32.mrb[0].mxu0
      %1111 = vmatprep.mubr.f32.mxu0 0.0
      %1112 = vmatmul.mubr.f32.gmra.mrb[0].mxu0 %v994
      %v1113 = vpop.f32.mrb[0].mxu0
      %v1114 = vadd.f32 0.0, %v1113
      %v1115 = vpop.f32.mrb[0].mxu0
      %1116 = vmatprep.mubr.f32.mxu0 0.0
      %1117 = vmatmul.mubr.f32.gmra.mrb[0].mxu0 %v997
      %v1118 = vpop.f32.mrb[0].mxu0
      %v1119 = vadd.f32 0.0, %v1118
      %v1120 = vpop.f32.mrb[0].mxu0
      %1121 = vmatprep.mubr.f32.mxu0 0.0
      %1122 = vmatmul.mubr.f32.gmra.mrb[0].mxu0 %v1000
      %v1123 = vpop.f32.mrb[0].mxu0
      %v1124 = vadd.f32 0.0, %v1123
      %v1125 = vpop.f32.mrb[0].mxu0
      %1126 = vmatprep.mubr.f32.mxu0 0.0
      %1127 = vmatmul.mubr.f32.gmra.mrb[0].mxu0 %v1003
      %v1128 = vpop.f32.mrb[0].mxu0
      %v1129 = vadd.f32 0.0, %v1128
      %v1130 = vpop.f32.mrb[0].mxu0
      %1131 = vmatprep.mubr.f32.mxu0 0.0
      %1132 = vmatmul.mubr.f32.gmra.mrb[0].mxu0 %v1006
      %v1133 = vpop.f32.mrb[0].mxu0
      %v1134 = vadd.f32 0.0, %v1133
      %v1135 = vpop.f32.mrb[0].mxu0
      %1136 = vmatprep.mubr.f32.mxu0 0.0
      %1137 = vmatmul.mubr.f32.gmra.mrb[0].mxu0 %v1009
      %v1138 = vpop.f32.mrb[0].mxu0
      %v1139 = vadd.f32 0.0, %v1138
      %v1140 = vpop.f32.mrb[0].mxu0
      %1141 = vmatprep.mubr.f32.mxu0 0.0
      %1142 = vmatmul.mubr.f32.gmra.mrb[0].mxu0 %v1012
      %v1143 = vpop.f32.mrb[0].mxu0
      %v1144 = vadd.f32 0.0, %v1143
      %v1145 = vpop.f32.mrb[0].mxu0
      %1146 = vmatprep.mubr.f32.mxu0 0.0
      %1147 = vmatmul.mubr.f32.gmra.mrb[0].mxu0 %v1015
      %v1148 = vpop.f32.mrb[0].mxu0
      %v1149 = vadd.f32 0.0, %v1148
      %v1150 = vpop.f32.mrb[0].mxu0
      %1151 = vmatprep.mubr.f32.mxu0 0.0
      %1152 = vmatmul.mubr.f32.gmra.mrb[0].mxu0 %v1018
      %v1153 = vpop.f32.mrb[0].mxu0
      %v1154 = vadd.f32 0.0, %v1153
      %v1155 = vpop.f32.mrb[0].mxu0
      %1156 = vmatprep.mubr.f32.mxu0 0.0
      %1157 = vmatmul.mubr.f32.gmra.mrb[0].mxu0 %v1021
      %v1158 = vpop.f32.mrb[0].mxu0
      %v1159 = vadd.f32 0.0, %v1158
      %v1160 = vpop.f32.mrb[0].mxu0
      %1161 = vmatprep.mubr.f32.mxu0 0.0
      %1162 = vmatmul.mubr.f32.gmra.mrb[0].mxu0 %v1024
      %v1163 = vpop.f32.mrb[0].mxu0
      %v1164 = vadd.f32 0.0, %v1163
      %v1165 = vpop.f32.mrb[0].mxu0
      %1166 = vmatprep.mubr.f32.mxu0 0.0
      %1167 = vmatmul.mubr.f32.gmra.mrb[0].mxu0 %v1027
      %v1168 = vpop.f32.mrb[0].mxu0
      %v1169 = vadd.f32 0.0, %v1168
      %v1170 = vpop.f32.mrb[0].mxu0
      %1171 = vmatprep.mubr.f32.mxu0 0.0
      %1172 = vmatmul.mubr.f32.gmra.mrb[0].mxu0 %v1030
      %v1173 = vpop.f32.mrb[0].mxu0
      %v1174 = vadd.f32 0.0, %v1173
      %v1175 = vpop.f32.mrb[0].mxu0
      %1176 = vdwg.mxu0
      %v1177 = vadd.f32 %v966, %v1099
      %v1178 = vadd.f32 %v967, %v1104
      %v1179 = vadd.f32 %v968, %v1109
      %v1180 = vadd.f32 %v969, %v1114
      %v1181 = vadd.f32 %v970, %v1119
      %v1182 = vadd.f32 %v971, %v1124
      %v1183 = vadd.f32 %v972, %v1129
      %v1184 = vadd.f32 %v973, %v1134
      %v1185 = vadd.f32 %v974, %v1139
      %v1186 = vadd.f32 %v975, %v1144
      %v1187 = vadd.f32 %v976, %v1149
      %v1188 = vadd.f32 %v977, %v1154
      %v1189 = vadd.f32 %v978, %v1159
      %v1190 = vadd.f32 %v979, %v1164
      %v1191 = vadd.f32 %v980, %v1169
      %v1192 = vadd.f32 %v981, %v1174
      %1193 = vst [vmem:[#allocation2] sm:$0xff] %v1177
      %1194 = vst [vmem:[#allocation2 + $0x8] sm:$0xff] %v1178
      %1195 = vst [vmem:[#allocation2 + $0x10] sm:$0xff] %v1179
      %1196 = vst [vmem:[#allocation2 + $0x18] sm:$0xff] %v1180
      %1197 = vst [vmem:[#allocation2 + $0x20] sm:$0xff] %v1181
      %1198 = vst [vmem:[#allocation2 + $0x28] sm:$0xff] %v1182
      %1199 = vst [vmem:[#allocation2 + $0x30] sm:$0xff] %v1183
      %1200 = vst [vmem:[#allocation2 + $0x38] sm:$0xff] %v1184
      %1201 = vst [vmem:[#allocation2 + $0x40] sm:$0xff] %v1185
      %1202 = vst [vmem:[#allocation2 + $0x48] sm:$0xff] %v1186
      %1203 = vst [vmem:[#allocation2 + $0x50] sm:$0xff] %v1187
      %1204 = vst [vmem:[#allocation2 + $0x58] sm:$0xff] %v1188
      %1205 = vst [vmem:[#allocation2 + $0x60] sm:$0xff] %v1189
      %1206 = vst [vmem:[#allocation2 + $0x68] sm:$0xff] %v1190
      %1207 = vst [vmem:[#allocation2 + $0x70] sm:$0xff] %v1191
      %1208 = vst [vmem:[#allocation2 + $0x78] sm:$0xff] %v1192
      %v1209 = vld [vmem:[#allocation2] sm:$0xff]
      %v1210 = vld [vmem:[#allocation2 + $0x8] sm:$0xff]
      %v1211 = vld [vmem:[#allocation2 + $0x10] sm:$0xff]
      %v1212 = vld [vmem:[#allocation2 + $0x18] sm:$0xff]
      %v1213 = vld [vmem:[#allocation2 + $0x20] sm:$0xff]
      %v1214 = vld [vmem:[#allocation2 + $0x28] sm:$0xff]
      %v1215 = vld [vmem:[#allocation2 + $0x30] sm:$0xff]
      %v1216 = vld [vmem:[#allocation2 + $0x38] sm:$0xff]
      %v1217 = vld [vmem:[#allocation2 + $0x40] sm:$0xff]
      %v1218 = vld [vmem:[#allocation2 + $0x48] sm:$0xff]
      %v1219 = vld [vmem:[#allocation2 + $0x50] sm:$0xff]
      %v1220 = vld [vmem:[#allocation2 + $0x58] sm:$0xff]
      %v1221 = vld [vmem:[#allocation2 + $0x60] sm:$0xff]
      %v1222 = vld [vmem:[#allocation2 + $0x68] sm:$0xff]
      %v1223 = vld [vmem:[#allocation2 + $0x70] sm:$0xff]
      %v1224 = vld [vmem:[#allocation2 + $0x78] sm:$0xff]
      %s1225 = scalar_lea.vmem %s391, 4
      %v1226 = vld [vmem:[%s1225] sm:$0xf]
      %v1228 = vsel %vm687, %v964, 0
      %v1231 = vsel %vm687, %v963, 0
      %v1234 = vsel %vm687, %v962, 0
      %v1237 = vsel %vm687, %v961, 0
      %v1240 = vsel %vm687, %v960, 0
      %v1243 = vsel %vm687, %v959, 0
      %v1246 = vsel %vm687, %v958, 0
      %v1249 = vsel %vm687, %v957, 0
      %v1252 = vsel %vm687, %v956, 0
      %v1255 = vsel %vm687, %v955, 0
      %v1258 = vsel %vm687, %v954, 0
      %v1261 = vsel %vm687, %v953, 0
      %v1264 = vsel %vm687, %v952, 0
      %v1267 = vsel %vm687, %v951, 0
      %v1270 = vsel %vm687, %v950, 0
      %v1273 = vsel %vm687, %v965, 0
      %v1276 = vsel %vm736, %v1226, 0
      %1278 = vmatprep.subr.mxu0 0.0
      %1279 = vmatpush1.msra.mxu0 %v1276
      %1280 = vmatprep.subr.mxu0 0.0
      %1281 = vmatpush1.msra.mxu0 0.0
      %1282 = vmatprep.subr.mxu0 0.0
      %1283 = vmatpush1.msra.mxu0 0.0
      %1284 = vmatprep.subr.mxu0 0.0
      %1285 = vmatpush1.msra.mxu0 0.0
      %1286 = vmatprep.subr.mxu0 0.0
      %1287 = vmatpush1.msra.mxu0 0.0
      %1288 = vmatprep.subr.mxu0 0.0
      %1289 = vmatpush1.msra.mxu0 0.0
      %1290 = vmatprep.subr.mxu0 0.0
      %1291 = vmatpush1.msra.mxu0 0.0
      %1292 = vmatprep.subr.mxu0 0.0
      %1293 = vmatpush1.msra.mxu0 0.0
      %1294 = vmatprep.subr.mxu0 0.0
      %1295 = vmatpush1.msra.mxu0 0.0
      %1296 = vmatprep.subr.mxu0 0.0
      %1297 = vmatpush1.msra.mxu0 0.0
      %1298 = vmatprep.subr.mxu0 0.0
      %1299 = vmatpush1.msra.mxu0 0.0
      %1300 = vmatprep.subr.mxu0 0.0
      %1301 = vmatpush1.msra.mxu0 0.0
      %1302 = vmatprep.subr.mxu0 0.0
      %1303 = vmatpush1.msra.mxu0 0.0
      %1304 = vmatprep.subr.mxu0 0.0
      %1305 = vmatpush1.msra.mxu0 0.0
      %1306 = vmatprep.subr.mxu0 0.0
      %1307 = vmatpush1.msra.mxu0 0.0
      %1308 = vmatprep.subr.mxu0 0.0
      %1309 = vmatpush1.msra.mxu0 0.0
      %1310 = vmatprep.subr.mxu0 0.0
      %1311 = vmatpush1.msra.mxu0 0.0
      %1312 = vmatprep.subr.mxu0 0.0
      %1313 = vmatpush1.msra.mxu0 0.0
      %1314 = vmatprep.subr.mxu0 0.0
      %1315 = vmatpush1.msra.mxu0 0.0
      %1316 = vmatprep.subr.mxu0 0.0
      %1317 = vmatpush1.msra.mxu0 0.0
      %1318 = vmatprep.subr.mxu0 0.0
      %1319 = vmatpush1.msra.mxu0 0.0
      %1320 = vmatprep.subr.mxu0 0.0
      %1321 = vmatpush1.msra.mxu0 0.0
      %1322 = vmatprep.subr.mxu0 0.0
      %1323 = vmatpush1.msra.mxu0 0.0
      %1324 = vmatprep.subr.mxu0 0.0
      %1325 = vmatpush1.msra.mxu0 0.0
      %1326 = vmatprep.subr.mxu0 0.0
      %1327 = vmatpush1.msra.mxu0 0.0
      %1328 = vmatprep.subr.mxu0 0.0
      %1329 = vmatpush1.msra.mxu0 0.0
      %1330 = vmatprep.subr.mxu0 0.0
      %1331 = vmatpush1.msra.mxu0 0.0
      %1332 = vmatprep.subr.mxu0 0.0
      %1333 = vmatpush1.msra.mxu0 0.0
      %1334 = vmatprep.subr.mxu0 0.0
      %1335 = vmatpush1.msra.mxu0 0.0
      %1336 = vmatprep.subr.mxu0 0.0
      %1337 = vmatpush1.msra.mxu0 0.0
      %1338 = vmatprep.subr.mxu0 0.0
      %1339 = vmatpush1.msra.mxu0 0.0
      %1340 = vmatprep.subr.mxu0 0.0
      %1341 = vmatpush1.msra.mxu0 0.0
      %1342 = vmatprep.mubr.f32.mxu0 0.0
      %1343 = vmatmul.mubr.f32.gmra.mrb[0].mxu0 %v1228
      %v1344 = vpop.f32.mrb[0].mxu0
      %v1345 = vadd.f32 0.0, %v1344
      %v1346 = vpop.f32.mrb[0].mxu0
      %1347 = vmatprep.mubr.f32.mxu0 0.0
      %1348 = vmatmul.mubr.f32.gmra.mrb[0].mxu0 %v1231
      %v1349 = vpop.f32.mrb[0].mxu0
      %v1350 = vadd.f32 0.0, %v1349
      %v1351 = vpop.f32.mrb[0].mxu0
      %1352 = vmatprep.mubr.f32.mxu0 0.0
      %1353 = vmatmul.mubr.f32.gmra.mrb[0].mxu0 %v1234
      %v1354 = vpop.f32.mrb[0].mxu0
      %v1355 = vadd.f32 0.0, %v1354
      %v1356 = vpop.f32.mrb[0].mxu0
      %1357 = vmatprep.mubr.f32.mxu0 0.0
      %1358 = vmatmul.mubr.f32.gmra.mrb[0].mxu0 %v1237
      %v1359 = vpop.f32.mrb[0].mxu0
      %v1360 = vadd.f32 0.0, %v1359
      %v1361 = vpop.f32.mrb[0].mxu0
      %1362 = vmatprep.mubr.f32.mxu0 0.0
      %1363 = vmatmul.mubr.f32.gmra.mrb[0].mxu0 %v1240
      %v1364 = vpop.f32.mrb[0].mxu0
      %v1365 = vadd.f32 0.0, %v1364
      %v1366 = vpop.f32.mrb[0].mxu0
      %1367 = vmatprep.mubr.f32.mxu0 0.0
      %1368 = vmatmul.mubr.f32.gmra.mrb[0].mxu0 %v1243
      %v1369 = vpop.f32.mrb[0].mxu0
      %v1370 = vadd.f32 0.0, %v1369
      %v1371 = vpop.f32.mrb[0].mxu0
      %1372 = vmatprep.mubr.f32.mxu0 0.0
      %1373 = vmatmul.mubr.f32.gmra.mrb[0].mxu0 %v1246
      %v1374 = vpop.f32.mrb[0].mxu0
      %v1375 = vadd.f32 0.0, %v1374
      %v1376 = vpop.f32.mrb[0].mxu0
      %1377 = vmatprep.mubr.f32.mxu0 0.0
      %1378 = vmatmul.mubr.f32.gmra.mrb[0].mxu0 %v1249
      %v1379 = vpop.f32.mrb[0].mxu0
      %v1380 = vadd.f32 0.0, %v1379
      %v1381 = vpop.f32.mrb[0].mxu0
      %1382 = vmatprep.mubr.f32.mxu0 0.0
      %1383 = vmatmul.mubr.f32.gmra.mrb[0].mxu0 %v1252
      %v1384 = vpop.f32.mrb[0].mxu0
      %v1385 = vadd.f32 0.0, %v1384
      %v1386 = vpop.f32.mrb[0].mxu0
      %1387 = vmatprep.mubr.f32.mxu0 0.0
      %1388 = vmatmul.mubr.f32.gmra.mrb[0].mxu0 %v1255
      %v1389 = vpop.f32.mrb[0].mxu0
      %v1390 = vadd.f32 0.0, %v1389
      %v1391 = vpop.f32.mrb[0].mxu0
      %1392 = vmatprep.mubr.f32.mxu0 0.0
      %1393 = vmatmul.mubr.f32.gmra.mrb[0].mxu0 %v1258
      %v1394 = vpop.f32.mrb[0].mxu0
      %v1395 = vadd.f32 0.0, %v1394
      %v1396 = vpop.f32.mrb[0].mxu0
      %1397 = vmatprep.mubr.f32.mxu0 0.0
      %1398 = vmatmul.mubr.f32.gmra.mrb[0].mxu0 %v1261
      %v1399 = vpop.f32.mrb[0].mxu0
      %v1400 = vadd.f32 0.0, %v1399
      %v1401 = vpop.f32.mrb[0].mxu0
      %1402 = vmatprep.mubr.f32.mxu0 0.0
      %1403 = vmatmul.mubr.f32.gmra.mrb[0].mxu0 %v1264
      %v1404 = vpop.f32.mrb[0].mxu0
      %v1405 = vadd.f32 0.0, %v1404
      %v1406 = vpop.f32.mrb[0].mxu0
      %1407 = vmatprep.mubr.f32.mxu0 0.0
      %1408 = vmatmul.mubr.f32.gmra.mrb[0].mxu0 %v1267
      %v1409 = vpop.f32.mrb[0].mxu0
      %v1410 = vadd.f32 0.0, %v1409
      %v1411 = vpop.f32.mrb[0].mxu0
      %1412 = vmatprep.mubr.f32.mxu0 0.0
      %1413 = vmatmul.mubr.f32.gmra.mrb[0].mxu0 %v1270
      %v1414 = vpop.f32.mrb[0].mxu0
      %v1415 = vadd.f32 0.0, %v1414
      %v1416 = vpop.f32.mrb[0].mxu0
      %1417 = vmatprep.mubr.f32.mxu0 0.0
      %1418 = vmatmul.mubr.f32.gmra.mrb[0].mxu0 %v1273
      %v1419 = vpop.f32.mrb[0].mxu0
      %v1420 = vadd.f32 0.0, %v1419
      %v1421 = vpop.f32.mrb[0].mxu0
      %1422 = vdwg.mxu0
      %v1423 = vadd.f32 %v1209, %v1345
      %v1424 = vadd.f32 %v1210, %v1350
      %v1425 = vadd.f32 %v1211, %v1355
      %v1426 = vadd.f32 %v1212, %v1360
      %v1427 = vadd.f32 %v1213, %v1365
      %v1428 = vadd.f32 %v1214, %v1370
      %v1429 = vadd.f32 %v1215, %v1375
      %v1430 = vadd.f32 %v1216, %v1380
      %v1431 = vadd.f32 %v1217, %v1385
      %v1432 = vadd.f32 %v1218, %v1390
      %v1433 = vadd.f32 %v1219, %v1395
      %v1434 = vadd.f32 %v1220, %v1400
      %v1435 = vadd.f32 %v1221, %v1405
      %v1436 = vadd.f32 %v1222, %v1410
      %v1437 = vadd.f32 %v1223, %v1415
      %v1438 = vadd.f32 %v1224, %v1420
      %1439 = vst [vmem:[#allocation2] sm:$0xff] %v1423
      %1440 = vst [vmem:[#allocation2 + $0x8] sm:$0xff] %v1424
      %1441 = vst [vmem:[#allocation2 + $0x10] sm:$0xff] %v1425
      %1442 = vst [vmem:[#allocation2 + $0x18] sm:$0xff] %v1426
      %1443 = vst [vmem:[#allocation2 + $0x20] sm:$0xff] %v1427
      %1444 = vst [vmem:[#allocation2 + $0x28] sm:$0xff] %v1428
      %1445 = vst [vmem:[#allocation2 + $0x30] sm:$0xff] %v1429
      %1446 = vst [vmem:[#allocation2 + $0x38] sm:$0xff] %v1430
      %1447 = vst [vmem:[#allocation2 + $0x40] sm:$0xff] %v1431
      %1448 = vst [vmem:[#allocation2 + $0x48] sm:$0xff] %v1432
      %1449 = vst [vmem:[#allocation2 + $0x50] sm:$0xff] %v1433
      %1450 = vst [vmem:[#allocation2 + $0x58] sm:$0xff] %v1434
      %1451 = vst [vmem:[#allocation2 + $0x60] sm:$0xff] %v1435
      %1452 = vst [vmem:[#allocation2 + $0x68] sm:$0xff] %v1436
      %1453 = vst [vmem:[#allocation2 + $0x70] sm:$0xff] %v1437
      %1454 = vst [vmem:[#allocation2 + $0x78] sm:$0xff] %v1438
      %s1455 = scalar_lea.vmem %s363, 32
      %v1456 = vld [vmem:[%s1455] sm:$0xff]
      %v1457 = vld [vmem:[%s1455 + $0x8] sm:$0xff]
      %v1458 = vld [vmem:[%s1455 + $0x20] sm:$0xff]
      %v1459 = vld [vmem:[%s1455 + $0x28] sm:$0xff]
      %v1460 = vld [vmem:[%s1455 + $0x40] sm:$0xff]
      %v1461 = vld [vmem:[%s1455 + $0x48] sm:$0xff]
      %v1462 = vld [vmem:[%s1455 + $0x60] sm:$0xff]
      %v1463 = vld [vmem:[%s1455 + $0x68] sm:$0xff]
      %v1464 = vld [vmem:[%s1455 + $0x80] sm:$0xff]
      %v1465 = vld [vmem:[%s1455 + $0x88] sm:$0xff]
      %v1466 = vld [vmem:[%s1455 + $0xa0] sm:$0xff]
      %v1467 = vld [vmem:[%s1455 + $0xa8] sm:$0xff]
      %v1468 = vld [vmem:[%s1455 + $0xc0] sm:$0xff]
      %v1469 = vld [vmem:[%s1455 + $0xc8] sm:$0xff]
      %v1470 = vrot.slane %v1456, 1
      %v1471 = vrot.slane %v1457, 1
      %v1472 = vrot.slane %v1458, 1
      %v1473 = vrot.slane %v1459, 1
      %v1474 = vrot.slane %v1460, 1
      %v1475 = vrot.slane %v1461, 1
      %v1476 = vrot.slane %v1462, 1
      %v1477 = vrot.slane %v1463, 1
      %v1478 = vrot.slane %v1464, 1
      %v1479 = vrot.slane %v1465, 1
      %v1480 = vrot.slane %v1466, 1
      %v1481 = vrot.slane %v1467, 1
      %v1482 = vrot.slane %v1468, 1
      %v1483 = vrot.slane %v1469, 1
      %v1484 = vsel %vm442, %v1482, %v1483
      %v1485 = vsel %vm442, %v1481, %v1482
      %v1486 = vsel %vm442, %v1480, %v1481
      %v1487 = vsel %vm442, %v1479, %v1480
      %v1488 = vsel %vm442, %v1478, %v1479
      %v1489 = vsel %vm442, %v1477, %v1478
      %v1490 = vsel %vm442, %v1476, %v1477
      %v1491 = vsel %vm442, %v1475, %v1476
      %v1492 = vsel %vm442, %v1474, %v1475
      %v1493 = vsel %vm442, %v1473, %v1474
      %v1494 = vsel %vm442, %v1472, %v1473
      %v1495 = vsel %vm442, %v1471, %v1472
      %v1496 = vsel %vm442, %v1470, %v1471
      %v1497 = vsel %vm442, %v1483, %v1470
      %v1498 = vld [vmem:[#allocation2] sm:$0xff]
      %v1499 = vld [vmem:[#allocation2 + $0x8] sm:$0xff]
      %v1500 = vld [vmem:[#allocation2 + $0x10] sm:$0xff]
      %v1501 = vld [vmem:[#allocation2 + $0x18] sm:$0xff]
      %v1502 = vld [vmem:[#allocation2 + $0x20] sm:$0xff]
      %v1503 = vld [vmem:[#allocation2 + $0x28] sm:$0xff]
      %v1504 = vld [vmem:[#allocation2 + $0x30] sm:$0xff]
      %v1505 = vld [vmem:[#allocation2 + $0x38] sm:$0xff]
      %v1506 = vld [vmem:[#allocation2 + $0x40] sm:$0xff]
      %v1507 = vld [vmem:[#allocation2 + $0x48] sm:$0xff]
      %v1508 = vld [vmem:[#allocation2 + $0x50] sm:$0xff]
      %v1509 = vld [vmem:[#allocation2 + $0x58] sm:$0xff]
      %v1510 = vld [vmem:[#allocation2 + $0x60] sm:$0xff]
      %v1511 = vld [vmem:[#allocation2 + $0x68] sm:$0xff]
      %s1512 = scalar_lea.vmem %s387, 16
      %v1513 = vld [vmem:[%s1512] sm:$0xff]
      %v1515 = vsel %vm460, %v1456, 0
      %v1518 = vsel %vm460, %v1457, 0
      %v1521 = vsel %vm460, %v1458, 0
      %v1524 = vsel %vm460, %v1459, 0
      %v1527 = vsel %vm460, %v1460, 0
      %v1530 = vsel %vm460, %v1461, 0
      %v1533 = vsel %vm460, %v1462, 0
      %v1536 = vsel %vm460, %v1463, 0
      %v1539 = vsel %vm460, %v1464, 0
      %v1542 = vsel %vm460, %v1465, 0
      %v1545 = vsel %vm460, %v1466, 0
      %v1548 = vsel %vm460, %v1467, 0
      %v1551 = vsel %vm460, %v1468, 0
      %v1554 = vsel %vm460, %v1469, 0
      %1556 = vmatprep.subr.mxu0 0.0
      %1557 = vmatpush1.msra.mxu0 %v1513
      %1558 = vmatprep.subr.mxu0 0.0
      %1559 = vmatpush1.msra.mxu0 0.0
      %1560 = vmatprep.subr.mxu0 0.0
      %1561 = vmatpush1.msra.mxu0 0.0
      %1562 = vmatprep.subr.mxu0 0.0
      %1563 = vmatpush1.msra.mxu0 0.0
      %1564 = vmatprep.subr.mxu0 0.0
      %1565 = vmatpush1.msra.mxu0 0.0
      %1566 = vmatprep.subr.mxu0 0.0
      %1567 = vmatpush1.msra.mxu0 0.0
      %1568 = vmatprep.subr.mxu0 0.0
      %1569 = vmatpush1.msra.mxu0 0.0
      %1570 = vmatprep.subr.mxu0 0.0
      %1571 = vmatpush1.msra.mxu0 0.0
      %1572 = vmatprep.subr.mxu0 0.0
      %1573 = vmatpush1.msra.mxu0 0.0
      %1574 = vmatprep.subr.mxu0 0.0
      %1575 = vmatpush1.msra.mxu0 0.0
      %1576 = vmatprep.subr.mxu0 0.0
      %1577 = vmatpush1.msra.mxu0 0.0
      %1578 = vmatprep.subr.mxu0 0.0
      %1579 = vmatpush1.msra.mxu0 0.0
      %1580 = vmatprep.subr.mxu0 0.0
      %1581 = vmatpush1.msra.mxu0 0.0
      %1582 = vmatprep.subr.mxu0 0.0
      %1583 = vmatpush1.msra.mxu0 0.0
      %1584 = vmatprep.subr.mxu0 0.0
      %1585 = vmatpush1.msra.mxu0 0.0
      %1586 = vmatprep.subr.mxu0 0.0
      %1587 = vmatpush1.msra.mxu0 0.0
      %1588 = vmatprep.subr.mxu0 0.0
      %1589 = vmatpush1.msra.mxu0 0.0
      %1590 = vmatprep.subr.mxu0 0.0
      %1591 = vmatpush1.msra.mxu0 0.0
      %1592 = vmatprep.subr.mxu0 0.0
      %1593 = vmatpush1.msra.mxu0 0.0
      %1594 = vmatprep.subr.mxu0 0.0
      %1595 = vmatpush1.msra.mxu0 0.0
      %1596 = vmatprep.subr.mxu0 0.0
      %1597 = vmatpush1.msra.mxu0 0.0
      %1598 = vmatprep.subr.mxu0 0.0
      %1599 = vmatpush1.msra.mxu0 0.0
      %1600 = vmatprep.subr.mxu0 0.0
      %1601 = vmatpush1.msra.mxu0 0.0
      %1602 = vmatprep.subr.mxu0 0.0
      %1603 = vmatpush1.msra.mxu0 0.0
      %1604 = vmatprep.subr.mxu0 0.0
      %1605 = vmatpush1.msra.mxu0 0.0
      %1606 = vmatprep.subr.mxu0 0.0
      %1607 = vmatpush1.msra.mxu0 0.0
      %1608 = vmatprep.subr.mxu0 0.0
      %1609 = vmatpush1.msra.mxu0 0.0
      %1610 = vmatprep.subr.mxu0 0.0
      %1611 = vmatpush1.msra.mxu0 0.0
      %1612 = vmatprep.subr.mxu0 0.0
      %1613 = vmatpush1.msra.mxu0 0.0
      %1614 = vmatprep.subr.mxu0 0.0
      %1615 = vmatpush1.msra.mxu0 0.0
      %1616 = vmatprep.subr.mxu0 0.0
      %1617 = vmatpush1.msra.mxu0 0.0
      %1618 = vmatprep.subr.mxu0 0.0
      %1619 = vmatpush1.msra.mxu0 0.0
      %1620 = vmatprep.mubr.f32.mxu0 0.0
      %1621 = vmatmul.mubr.f32.gmra.mrb[0].mxu0 %v1515
      %v1622 = vpop.f32.mrb[0].mxu0
      %v1623 = vadd.f32 0.0, %v1622
      %v1624 = vpop.f32.mrb[0].mxu0
      %1625 = vmatprep.mubr.f32.mxu0 0.0
      %1626 = vmatmul.mubr.f32.gmra.mrb[0].mxu0 %v1518
      %v1627 = vpop.f32.mrb[0].mxu0
      %v1628 = vadd.f32 0.0, %v1627
      %v1629 = vpop.f32.mrb[0].mxu0
      %1630 = vmatprep.mubr.f32.mxu0 0.0
      %1631 = vmatmul.mubr.f32.gmra.mrb[0].mxu0 %v1521
      %v1632 = vpop.f32.mrb[0].mxu0
      %v1633 = vadd.f32 0.0, %v1632
      %v1634 = vpop.f32.mrb[0].mxu0
      %1635 = vmatprep.mubr.f32.mxu0 0.0
      %1636 = vmatmul.mubr.f32.gmra.mrb[0].mxu0 %v1524
      %v1637 = vpop.f32.mrb[0].mxu0
      %v1638 = vadd.f32 0.0, %v1637
      %v1639 = vpop.f32.mrb[0].mxu0
      %1640 = vmatprep.mubr.f32.mxu0 0.0
      %1641 = vmatmul.mubr.f32.gmra.mrb[0].mxu0 %v1527
      %v1642 = vpop.f32.mrb[0].mxu0
      %v1643 = vadd.f32 0.0, %v1642
      %v1644 = vpop.f32.mrb[0].mxu0
      %1645 = vmatprep.mubr.f32.mxu0 0.0
      %1646 = vmatmul.mubr.f32.gmra.mrb[0].mxu0 %v1530
      %v1647 = vpop.f32.mrb[0].mxu0
      %v1648 = vadd.f32 0.0, %v1647
      %v1649 = vpop.f32.mrb[0].mxu0
      %1650 = vmatprep.mubr.f32.mxu0 0.0
      %1651 = vmatmul.mubr.f32.gmra.mrb[0].mxu0 %v1533
      %v1652 = vpop.f32.mrb[0].mxu0
      %v1653 = vadd.f32 0.0, %v1652
      %v1654 = vpop.f32.mrb[0].mxu0
      %1655 = vmatprep.mubr.f32.mxu0 0.0
      %1656 = vmatmul.mubr.f32.gmra.mrb[0].mxu0 %v1536
      %v1657 = vpop.f32.mrb[0].mxu0
      %v1658 = vadd.f32 0.0, %v1657
      %v1659 = vpop.f32.mrb[0].mxu0
      %1660 = vmatprep.mubr.f32.mxu0 0.0
      %1661 = vmatmul.mubr.f32.gmra.mrb[0].mxu0 %v1539
      %v1662 = vpop.f32.mrb[0].mxu0
      %v1663 = vadd.f32 0.0, %v1662
      %v1664 = vpop.f32.mrb[0].mxu0
      %1665 = vmatprep.mubr.f32.mxu0 0.0
      %1666 = vmatmul.mubr.f32.gmra.mrb[0].mxu0 %v1542
      %v1667 = vpop.f32.mrb[0].mxu0
      %v1668 = vadd.f32 0.0, %v1667
      %v1669 = vpop.f32.mrb[0].mxu0
      %1670 = vmatprep.mubr.f32.mxu0 0.0
      %1671 = vmatmul.mubr.f32.gmra.mrb[0].mxu0 %v1545
      %v1672 = vpop.f32.mrb[0].mxu0
      %v1673 = vadd.f32 0.0, %v1672
      %v1674 = vpop.f32.mrb[0].mxu0
      %1675 = vmatprep.mubr.f32.mxu0 0.0
      %1676 = vmatmul.mubr.f32.gmra.mrb[0].mxu0 %v1548
      %v1677 = vpop.f32.mrb[0].mxu0
      %v1678 = vadd.f32 0.0, %v1677
      %v1679 = vpop.f32.mrb[0].mxu0
      %1680 = vmatprep.mubr.f32.mxu0 0.0
      %1681 = vmatmul.mubr.f32.gmra.mrb[0].mxu0 %v1551
      %v1682 = vpop.f32.mrb[0].mxu0
      %v1683 = vadd.f32 0.0, %v1682
      %v1684 = vpop.f32.mrb[0].mxu0
      %1685 = vmatprep.mubr.f32.mxu0 0.0
      %1686 = vmatmul.mubr.f32.gmra.mrb[0].mxu0 %v1554
      %v1687 = vpop.f32.mrb[0].mxu0
      %v1688 = vadd.f32 0.0, %v1687
      %v1689 = vpop.f32.mrb[0].mxu0
      %1690 = vdwg.mxu0
      %v1691 = vadd.f32 %v1498, %v1623
      %v1692 = vadd.f32 %v1499, %v1628
      %v1693 = vadd.f32 %v1500, %v1633
      %v1694 = vadd.f32 %v1501, %v1638
      %v1695 = vadd.f32 %v1502, %v1643
      %v1696 = vadd.f32 %v1503, %v1648
      %v1697 = vadd.f32 %v1504, %v1653
      %v1698 = vadd.f32 %v1505, %v1658
      %v1699 = vadd.f32 %v1506, %v1663
      %v1700 = vadd.f32 %v1507, %v1668
      %v1701 = vadd.f32 %v1508, %v1673
      %v1702 = vadd.f32 %v1509, %v1678
      %v1703 = vadd.f32 %v1510, %v1683
      %v1704 = vadd.f32 %v1511, %v1688
      %1705 = vst [vmem:[#allocation2] sm:$0xff] %v1691
      %1706 = vst [vmem:[#allocation2 + $0x8] sm:$0xff] %v1692
      %1707 = vst [vmem:[#allocation2 + $0x10] sm:$0xff] %v1693
      %1708 = vst [vmem:[#allocation2 + $0x18] sm:$0xff] %v1694
      %1709 = vst [vmem:[#allocation2 + $0x20] sm:$0xff] %v1695
      %1710 = vst [vmem:[#allocation2 + $0x28] sm:$0xff] %v1696
      %1711 = vst [vmem:[#allocation2 + $0x30] sm:$0xff] %v1697
      %1712 = vst [vmem:[#allocation2 + $0x38] sm:$0xff] %v1698
      %1713 = vst [vmem:[#allocation2 + $0x40] sm:$0xff] %v1699
      %1714 = vst [vmem:[#allocation2 + $0x48] sm:$0xff] %v1700
      %1715 = vst [vmem:[#allocation2 + $0x50] sm:$0xff] %v1701
      %1716 = vst [vmem:[#allocation2 + $0x58] sm:$0xff] %v1702
      %1717 = vst [vmem:[#allocation2 + $0x60] sm:$0xff] %v1703
      %1718 = vst [vmem:[#allocation2 + $0x68] sm:$0xff] %v1704
      %v1719 = vld [vmem:[#allocation2] sm:$0xff]
      %v1720 = vld [vmem:[#allocation2 + $0x8] sm:$0xff]
      %v1721 = vld [vmem:[#allocation2 + $0x10] sm:$0xff]
      %v1722 = vld [vmem:[#allocation2 + $0x18] sm:$0xff]
      %v1723 = vld [vmem:[#allocation2 + $0x20] sm:$0xff]
      %v1724 = vld [vmem:[#allocation2 + $0x28] sm:$0xff]
      %v1725 = vld [vmem:[#allocation2 + $0x30] sm:$0xff]
      %v1726 = vld [vmem:[#allocation2 + $0x38] sm:$0xff]
      %v1727 = vld [vmem:[#allocation2 + $0x40] sm:$0xff]
      %v1728 = vld [vmem:[#allocation2 + $0x48] sm:$0xff]
      %v1729 = vld [vmem:[#allocation2 + $0x50] sm:$0xff]
      %v1730 = vld [vmem:[#allocation2 + $0x58] sm:$0xff]
      %v1731 = vld [vmem:[#allocation2 + $0x60] sm:$0xff]
      %v1732 = vld [vmem:[#allocation2 + $0x68] sm:$0xff]
      %s1733 = scalar_lea.vmem %s391, 8
      %v1734 = vld [vmem:[%s1733] sm:$0xf]
      %v1736 = vsel %vm687, %v1496, 0
      %v1739 = vsel %vm687, %v1495, 0
      %v1742 = vsel %vm687, %v1494, 0
      %v1745 = vsel %vm687, %v1493, 0
      %v1748 = vsel %vm687, %v1492, 0
      %v1751 = vsel %vm687, %v1491, 0
      %v1754 = vsel %vm687, %v1490, 0
      %v1757 = vsel %vm687, %v1489, 0
      %v1760 = vsel %vm687, %v1488, 0
      %v1763 = vsel %vm687, %v1487, 0
      %v1766 = vsel %vm687, %v1486, 0
      %v1769 = vsel %vm687, %v1485, 0
      %v1772 = vsel %vm687, %v1484, 0
      %v1775 = vsel %vm687, %v1497, 0
      %v1778 = vsel %vm736, %v1734, 0
      %1780 = vmatprep.subr.mxu0 0.0
      %1781 = vmatpush1.msra.mxu0 %v1778
      %1782 = vmatprep.subr.mxu0 0.0
      %1783 = vmatpush1.msra.mxu0 0.0
      %1784 = vmatprep.subr.mxu0 0.0
      %1785 = vmatpush1.msra.mxu0 0.0
      %1786 = vmatprep.subr.mxu0 0.0
      %1787 = vmatpush1.msra.mxu0 0.0
      %1788 = vmatprep.subr.mxu0 0.0
      %1789 = vmatpush1.msra.mxu0 0.0
      %1790 = vmatprep.subr.mxu0 0.0
      %1791 = vmatpush1.msra.mxu0 0.0
      %1792 = vmatprep.subr.mxu0 0.0
      %1793 = vmatpush1.msra.mxu0 0.0
      %1794 = vmatprep.subr.mxu0 0.0
      %1795 = vmatpush1.msra.mxu0 0.0
      %1796 = vmatprep.subr.mxu0 0.0
      %1797 = vmatpush1.msra.mxu0 0.0
      %1798 = vmatprep.subr.mxu0 0.0
      %1799 = vmatpush1.msra.mxu0 0.0
      %1800 = vmatprep.subr.mxu0 0.0
      %1801 = vmatpush1.msra.mxu0 0.0
      %1802 = vmatprep.subr.mxu0 0.0
      %1803 = vmatpush1.msra.mxu0 0.0
      %1804 = vmatprep.subr.mxu0 0.0
      %1805 = vmatpush1.msra.mxu0 0.0
      %1806 = vmatprep.subr.mxu0 0.0
      %1807 = vmatpush1.msra.mxu0 0.0
      %1808 = vmatprep.subr.mxu0 0.0
      %1809 = vmatpush1.msra.mxu0 0.0
      %1810 = vmatprep.subr.mxu0 0.0
      %1811 = vmatpush1.msra.mxu0 0.0
      %1812 = vmatprep.subr.mxu0 0.0
      %1813 = vmatpush1.msra.mxu0 0.0
      %1814 = vmatprep.subr.mxu0 0.0
      %1815 = vmatpush1.msra.mxu0 0.0
      %1816 = vmatprep.subr.mxu0 0.0
      %1817 = vmatpush1.msra.mxu0 0.0
      %1818 = vmatprep.subr.mxu0 0.0
      %1819 = vmatpush1.msra.mxu0 0.0
      %1820 = vmatprep.subr.mxu0 0.0
      %1821 = vmatpush1.msra.mxu0 0.0
      %1822 = vmatprep.subr.mxu0 0.0
      %1823 = vmatpush1.msra.mxu0 0.0
      %1824 = vmatprep.subr.mxu0 0.0
      %1825 = vmatpush1.msra.mxu0 0.0
      %1826 = vmatprep.subr.mxu0 0.0
      %1827 = vmatpush1.msra.mxu0 0.0
      %1828 = vmatprep.subr.mxu0 0.0
      %1829 = vmatpush1.msra.mxu0 0.0
      %1830 = vmatprep.subr.mxu0 0.0
      %1831 = vmatpush1.msra.mxu0 0.0
      %1832 = vmatprep.subr.mxu0 0.0
      %1833 = vmatpush1.msra.mxu0 0.0
      %1834 = vmatprep.subr.mxu0 0.0
      %1835 = vmatpush1.msra.mxu0 0.0
      %1836 = vmatprep.subr.mxu0 0.0
      %1837 = vmatpush1.msra.mxu0 0.0
      %1838 = vmatprep.subr.mxu0 0.0
      %1839 = vmatpush1.msra.mxu0 0.0
      %1840 = vmatprep.subr.mxu0 0.0
      %1841 = vmatpush1.msra.mxu0 0.0
      %1842 = vmatprep.subr.mxu0 0.0
      %1843 = vmatpush1.msra.mxu0 0.0
      %1844 = vmatprep.mubr.f32.mxu0 0.0
      %1845 = vmatmul.mubr.f32.gmra.mrb[0].mxu0 %v1736
      %v1846 = vpop.f32.mrb[0].mxu0
      %v1847 = vadd.f32 0.0, %v1846
      %v1848 = vpop.f32.mrb[0].mxu0
      %1849 = vmatprep.mubr.f32.mxu0 0.0
      %1850 = vmatmul.mubr.f32.gmra.mrb[0].mxu0 %v1739
      %v1851 = vpop.f32.mrb[0].mxu0
      %v1852 = vadd.f32 0.0, %v1851
      %v1853 = vpop.f32.mrb[0].mxu0
      %1854 = vmatprep.mubr.f32.mxu0 0.0
      %1855 = vmatmul.mubr.f32.gmra.mrb[0].mxu0 %v1742
      %v1856 = vpop.f32.mrb[0].mxu0
      %v1857 = vadd.f32 0.0, %v1856
      %v1858 = vpop.f32.mrb[0].mxu0
      %1859 = vmatprep.mubr.f32.mxu0 0.0
      %1860 = vmatmul.mubr.f32.gmra.mrb[0].mxu0 %v1745
      %v1861 = vpop.f32.mrb[0].mxu0
      %v1862 = vadd.f32 0.0, %v1861
      %v1863 = vpop.f32.mrb[0].mxu0
      %1864 = vmatprep.mubr.f32.mxu0 0.0
      %1865 = vmatmul.mubr.f32.gmra.mrb[0].mxu0 %v1748
      %v1866 = vpop.f32.mrb[0].mxu0
      %v1867 = vadd.f32 0.0, %v1866
      %v1868 = vpop.f32.mrb[0].mxu0
      %1869 = vmatprep.mubr.f32.mxu0 0.0
      %1870 = vmatmul.mubr.f32.gmra.mrb[0].mxu0 %v1751
      %v1871 = vpop.f32.mrb[0].mxu0
      %v1872 = vadd.f32 0.0, %v1871
      %v1873 = vpop.f32.mrb[0].mxu0
      %1874 = vmatprep.mubr.f32.mxu0 0.0
      %1875 = vmatmul.mubr.f32.gmra.mrb[0].mxu0 %v1754
      %v1876 = vpop.f32.mrb[0].mxu0
      %v1877 = vadd.f32 0.0, %v1876
      %v1878 = vpop.f32.mrb[0].mxu0
      %1879 = vmatprep.mubr.f32.mxu0 0.0
      %1880 = vmatmul.mubr.f32.gmra.mrb[0].mxu0 %v1757
      %v1881 = vpop.f32.mrb[0].mxu0
      %v1882 = vadd.f32 0.0, %v1881
      %v1883 = vpop.f32.mrb[0].mxu0
      %1884 = vmatprep.mubr.f32.mxu0 0.0
      %1885 = vmatmul.mubr.f32.gmra.mrb[0].mxu0 %v1760
      %v1886 = vpop.f32.mrb[0].mxu0
      %v1887 = vadd.f32 0.0, %v1886
      %v1888 = vpop.f32.mrb[0].mxu0
      %1889 = vmatprep.mubr.f32.mxu0 0.0
      %1890 = vmatmul.mubr.f32.gmra.mrb[0].mxu0 %v1763
      %v1891 = vpop.f32.mrb[0].mxu0
      %v1892 = vadd.f32 0.0, %v1891
      %v1893 = vpop.f32.mrb[0].mxu0
      %1894 = vmatprep.mubr.f32.mxu0 0.0
      %1895 = vmatmul.mubr.f32.gmra.mrb[0].mxu0 %v1766
      %v1896 = vpop.f32.mrb[0].mxu0
      %v1897 = vadd.f32 0.0, %v1896
      %v1898 = vpop.f32.mrb[0].mxu0
      %1899 = vmatprep.mubr.f32.mxu0 0.0
      %1900 = vmatmul.mubr.f32.gmra.mrb[0].mxu0 %v1769
      %v1901 = vpop.f32.mrb[0].mxu0
      %v1902 = vadd.f32 0.0, %v1901
      %v1903 = vpop.f32.mrb[0].mxu0
      %1904 = vmatprep.mubr.f32.mxu0 0.0
      %1905 = vmatmul.mubr.f32.gmra.mrb[0].mxu0 %v1772
      %v1906 = vpop.f32.mrb[0].mxu0
      %v1907 = vadd.f32 0.0, %v1906
      %v1908 = vpop.f32.mrb[0].mxu0
      %1909 = vmatprep.mubr.f32.mxu0 0.0
      %1910 = vmatmul.mubr.f32.gmra.mrb[0].mxu0 %v1775
      %v1911 = vpop.f32.mrb[0].mxu0
      %v1912 = vadd.f32 0.0, %v1911
      %v1913 = vpop.f32.mrb[0].mxu0
      %1914 = vdwg.mxu0
      %v1915 = vadd.f32 %v1719, %v1847
      %v1916 = vadd.f32 %v1720, %v1852
      %v1917 = vadd.f32 %v1721, %v1857
      %v1918 = vadd.f32 %v1722, %v1862
      %v1919 = vadd.f32 %v1723, %v1867
      %v1920 = vadd.f32 %v1724, %v1872
      %v1921 = vadd.f32 %v1725, %v1877
      %v1922 = vadd.f32 %v1726, %v1882
      %v1923 = vadd.f32 %v1727, %v1887
      %v1924 = vadd.f32 %v1728, %v1892
      %v1925 = vadd.f32 %v1729, %v1897
      %v1926 = vadd.f32 %v1730, %v1902
      %v1927 = vadd.f32 %v1731, %v1907
      %v1928 = vadd.f32 %v1732, %v1912
      %1929 = vst [vmem:[#allocation2] sm:$0xff] %v1915
      %1930 = vst [vmem:[#allocation2 + $0x8] sm:$0xff] %v1916
      %1931 = vst [vmem:[#allocation2 + $0x10] sm:$0xff] %v1917
      %1932 = vst [vmem:[#allocation2 + $0x18] sm:$0xff] %v1918
      %1933 = vst [vmem:[#allocation2 + $0x20] sm:$0xff] %v1919
      %1934 = vst [vmem:[#allocation2 + $0x28] sm:$0xff] %v1920
      %1935 = vst [vmem:[#allocation2 + $0x30] sm:$0xff] %v1921
      %1936 = vst [vmem:[#allocation2 + $0x38] sm:$0xff] %v1922
      %1937 = vst [vmem:[#allocation2 + $0x40] sm:$0xff] %v1923
      %1938 = vst [vmem:[#allocation2 + $0x48] sm:$0xff] %v1924
      %1939 = vst [vmem:[#allocation2 + $0x50] sm:$0xff] %v1925
      %1940 = vst [vmem:[#allocation2 + $0x58] sm:$0xff] %v1926
      %1941 = vst [vmem:[#allocation2 + $0x60] sm:$0xff] %v1927
      %1942 = vst [vmem:[#allocation2 + $0x68] sm:$0xff] %v1928
      %v1943 = vld [vmem:[%s381] sm:$0xff]
      %v1944 = vld [vmem:[%s381 + $0x8] sm:$0xff]
      %v1945 = vrot.slane %v1943, 1
      %v1946 = vrot.slane %v1944, 1
      %v1947 = vsel %vm442, %v1945, %v1946
      %v1948 = vsel %vm442, %v1946, %v1945
      %v1949 = vld [vmem:[#allocation2 + $0x70] sm:$0xff]
      %v1950 = vld [vmem:[#allocation2 + $0x78] sm:$0xff]
      %v1951 = vld [vmem:[%s1512] sm:$0xff]
      %v1953 = vsel %vm460, %v1943, 0
      %v1956 = vsel %vm460, %v1944, 0
      %1958 = vmatprep.subr.mxu0 0.0
      %1959 = vmatpush1.msra.mxu0 %v1951
      %1960 = vmatprep.subr.mxu0 0.0
      %1961 = vmatpush1.msra.mxu0 0.0
      %1962 = vmatprep.subr.mxu0 0.0
      %1963 = vmatpush1.msra.mxu0 0.0
      %1964 = vmatprep.subr.mxu0 0.0
      %1965 = vmatpush1.msra.mxu0 0.0
      %1966 = vmatprep.subr.mxu0 0.0
      %1967 = vmatpush1.msra.mxu0 0.0
      %1968 = vmatprep.subr.mxu0 0.0
      %1969 = vmatpush1.msra.mxu0 0.0
      %1970 = vmatprep.subr.mxu0 0.0
      %1971 = vmatpush1.msra.mxu0 0.0
      %1972 = vmatprep.subr.mxu0 0.0
      %1973 = vmatpush1.msra.mxu0 0.0
      %1974 = vmatprep.subr.mxu0 0.0
      %1975 = vmatpush1.msra.mxu0 0.0
      %1976 = vmatprep.subr.mxu0 0.0
      %1977 = vmatpush1.msra.mxu0 0.0
      %1978 = vmatprep.subr.mxu0 0.0
      %1979 = vmatpush1.msra.mxu0 0.0
      %1980 = vmatprep.subr.mxu0 0.0
      %1981 = vmatpush1.msra.mxu0 0.0
      %1982 = vmatprep.subr.mxu0 0.0
      %1983 = vmatpush1.msra.mxu0 0.0
      %1984 = vmatprep.subr.mxu0 0.0
      %1985 = vmatpush1.msra.mxu0 0.0
      %1986 = vmatprep.subr.mxu0 0.0
      %1987 = vmatpush1.msra.mxu0 0.0
      %1988 = vmatprep.subr.mxu0 0.0
      %1989 = vmatpush1.msra.mxu0 0.0
      %1990 = vmatprep.subr.mxu0 0.0
      %1991 = vmatpush1.msra.mxu0 0.0
      %1992 = vmatprep.subr.mxu0 0.0
      %1993 = vmatpush1.msra.mxu0 0.0
      %1994 = vmatprep.subr.mxu0 0.0
      %1995 = vmatpush1.msra.mxu0 0.0
      %1996 = vmatprep.subr.mxu0 0.0
      %1997 = vmatpush1.msra.mxu0 0.0
      %1998 = vmatprep.subr.mxu0 0.0
      %1999 = vmatpush1.msra.mxu0 0.0
      %2000 = vmatprep.subr.mxu0 0.0
      %2001 = vmatpush1.msra.mxu0 0.0
      %2002 = vmatprep.subr.mxu0 0.0
      %2003 = vmatpush1.msra.mxu0 0.0
      %2004 = vmatprep.subr.mxu0 0.0
      %2005 = vmatpush1.msra.mxu0 0.0
      %2006 = vmatprep.subr.mxu0 0.0
      %2007 = vmatpush1.msra.mxu0 0.0
      %2008 = vmatprep.subr.mxu0 0.0
      %2009 = vmatpush1.msra.mxu0 0.0
      %2010 = vmatprep.subr.mxu0 0.0
      %2011 = vmatpush1.msra.mxu0 0.0
      %2012 = vmatprep.subr.mxu0 0.0
      %2013 = vmatpush1.msra.mxu0 0.0
      %2014 = vmatprep.subr.mxu0 0.0
      %2015 = vmatpush1.msra.mxu0 0.0
      %2016 = vmatprep.subr.mxu0 0.0
      %2017 = vmatpush1.msra.mxu0 0.0
      %2018 = vmatprep.subr.mxu0 0.0
      %2019 = vmatpush1.msra.mxu0 0.0
      %2020 = vmatprep.subr.mxu0 0.0
      %2021 = vmatpush1.msra.mxu0 0.0
      %2022 = vmatprep.mubr.f32.mxu0 0.0
      %2023 = vmatmul.mubr.f32.gmra.mrb[0].mxu0 %v1953
      %v2024 = vpop.f32.mrb[0].mxu0
      %v2025 = vadd.f32 0.0, %v2024
      %v2026 = vpop.f32.mrb[0].mxu0
      %2027 = vmatprep.mubr.f32.mxu0 0.0
      %2028 = vmatmul.mubr.f32.gmra.mrb[0].mxu0 %v1956
      %v2029 = vpop.f32.mrb[0].mxu0
      %v2030 = vadd.f32 0.0, %v2029
      %v2031 = vpop.f32.mrb[0].mxu0
      %2032 = vdwg.mxu0
      %v2033 = vadd.f32 %v1949, %v2025
      %v2034 = vadd.f32 %v1950, %v2030
      %2035 = vst [vmem:[#allocation2 + $0x70] sm:$0xff] %v2033
      %2036 = vst [vmem:[#allocation2 + $0x78] sm:$0xff] %v2034
      %v2037 = vld [vmem:[#allocation2 + $0x70] sm:$0xff]
      %v2038 = vld [vmem:[#allocation2 + $0x78] sm:$0xff]
      %v2039 = vld [vmem:[%s1733] sm:$0xf]
      %v2041 = vsel %vm687, %v1947, 0
      %v2044 = vsel %vm687, %v1948, 0
      %v2047 = vsel %vm736, %v2039, 0
      %2049 = vmatprep.subr.mxu0 0.0
      %2050 = vmatpush1.msra.mxu0 %v2047
      %2051 = vmatprep.subr.mxu0 0.0
      %2052 = vmatpush1.msra.mxu0 0.0
      %2053 = vmatprep.subr.mxu0 0.0
      %2054 = vmatpush1.msra.mxu0 0.0
      %2055 = vmatprep.subr.mxu0 0.0
      %2056 = vmatpush1.msra.mxu0 0.0
      %2057 = vmatprep.subr.mxu0 0.0
      %2058 = vmatpush1.msra.mxu0 0.0
      %2059 = vmatprep.subr.mxu0 0.0
      %2060 = vmatpush1.msra.mxu0 0.0
      %2061 = vmatprep.subr.mxu0 0.0
      %2062 = vmatpush1.msra.mxu0 0.0
      %2063 = vmatprep.subr.mxu0 0.0
      %2064 = vmatpush1.msra.mxu0 0.0
      %2065 = vmatprep.subr.mxu0 0.0
      %2066 = vmatpush1.msra.mxu0 0.0
      %2067 = vmatprep.subr.mxu0 0.0
      %2068 = vmatpush1.msra.mxu0 0.0
      %2069 = vmatprep.subr.mxu0 0.0
      %2070 = vmatpush1.msra.mxu0 0.0
      %2071 = vmatprep.subr.mxu0 0.0
      %2072 = vmatpush1.msra.mxu0 0.0
      %2073 = vmatprep.subr.mxu0 0.0
      %2074 = vmatpush1.msra.mxu0 0.0
      %2075 = vmatprep.subr.mxu0 0.0
      %2076 = vmatpush1.msra.mxu0 0.0
      %2077 = vmatprep.subr.mxu0 0.0
      %2078 = vmatpush1.msra.mxu0 0.0
      %2079 = vmatprep.subr.mxu0 0.0
      %2080 = vmatpush1.msra.mxu0 0.0
      %2081 = vmatprep.subr.mxu0 0.0
      %2082 = vmatpush1.msra.mxu0 0.0
      %2083 = vmatprep.subr.mxu0 0.0
      %2084 = vmatpush1.msra.mxu0 0.0
      %2085 = vmatprep.subr.mxu0 0.0
      %2086 = vmatpush1.msra.mxu0 0.0
      %2087 = vmatprep.subr.mxu0 0.0
      %2088 = vmatpush1.msra.mxu0 0.0
      %2089 = vmatprep.subr.mxu0 0.0
      %2090 = vmatpush1.msra.mxu0 0.0
      %2091 = vmatprep.subr.mxu0 0.0
      %2092 = vmatpush1.msra.mxu0 0.0
      %2093 = vmatprep.subr.mxu0 0.0
      %2094 = vmatpush1.msra.mxu0 0.0
      %2095 = vmatprep.subr.mxu0 0.0
      %2096 = vmatpush1.msra.mxu0 0.0
      %2097 = vmatprep.subr.mxu0 0.0
      %2098 = vmatpush1.msra.mxu0 0.0
      %2099 = vmatprep.subr.mxu0 0.0
      %2100 = vmatpush1.msra.mxu0 0.0
      %2101 = vmatprep.subr.mxu0 0.0
      %2102 = vmatpush1.msra.mxu0 0.0
      %2103 = vmatprep.subr.mxu0 0.0
      %2104 = vmatpush1.msra.mxu0 0.0
      %2105 = vmatprep.subr.mxu0 0.0
      %2106 = vmatpush1.msra.mxu0 0.0
      %2107 = vmatprep.subr.mxu0 0.0
      %2108 = vmatpush1.msra.mxu0 0.0
      %2109 = vmatprep.subr.mxu0 0.0
      %2110 = vmatpush1.msra.mxu0 0.0
      %2111 = vmatprep.subr.mxu0 0.0
      %2112 = vmatpush1.msra.mxu0 0.0
      %2113 = vmatprep.mubr.f32.mxu0 0.0
      %2114 = vmatmul.mubr.f32.gmra.mrb[0].mxu0 %v2041
      %v2115 = vpop.f32.mrb[0].mxu0
      %v2116 = vadd.f32 0.0, %v2115
      %v2117 = vpop.f32.mrb[0].mxu0
      %2118 = vmatprep.mubr.f32.mxu0 0.0
      %2119 = vmatmul.mubr.f32.gmra.mrb[0].mxu0 %v2044
      %v2120 = vpop.f32.mrb[0].mxu0
      %v2121 = vadd.f32 0.0, %v2120
      %v2122 = vpop.f32.mrb[0].mxu0
      %2123 = vdwg.mxu0
      %v2124 = vadd.f32 %v2037, %v2116
      %v2125 = vadd.f32 %v2038, %v2121
      %2126 = vst [vmem:[#allocation2 + $0x70] sm:$0xff] %v2124
      %2127 = vst [vmem:[#allocation2 + $0x78] sm:$0xff] %v2125
      %v2128 = vld [vmem:[#allocation2] sm:$0xff]
      %v2129 = vld [vmem:[#allocation2 + $0x8] sm:$0xff]
      %v2130 = vld [vmem:[#allocation2 + $0x10] sm:$0xff]
      %v2131 = vld [vmem:[#allocation2 + $0x18] sm:$0xff]
      %v2132 = vld [vmem:[#allocation2 + $0x20] sm:$0xff]
      %v2133 = vld [vmem:[#allocation2 + $0x28] sm:$0xff]
      %v2134 = vld [vmem:[#allocation2 + $0x30] sm:$0xff]
      %v2135 = vld [vmem:[#allocation2 + $0x38] sm:$0xff]
      %v2136 = vld [vmem:[#allocation2 + $0x40] sm:$0xff]
      %v2137 = vld [vmem:[#allocation2 + $0x48] sm:$0xff]
      %v2138 = vld [vmem:[#allocation2 + $0x50] sm:$0xff]
      %v2139 = vld [vmem:[#allocation2 + $0x58] sm:$0xff]
      %v2140 = vld [vmem:[#allocation2 + $0x60] sm:$0xff]
      %v2141 = vld [vmem:[#allocation2 + $0x68] sm:$0xff]
      %v2142 = vld [vmem:[#allocation2 + $0x70] sm:$0xff]
      %v2143 = vld [vmem:[#allocation2 + $0x78] sm:$0xff]
      %v2144 = vld [vmem:[%s394] sm:$0x1]
      %v2146 = vlaneseq
      %v2147 = vshrl.u32 %v2146, 7
      %v2148 = vsub.s32 0, %v2147
      %v2149 = vrot.slane %v2144, %v2148
      %v2151 = vadd.f32 %v2128, %v2149
      %v2152 = vadd.f32 %v2129, %v2149
      %v2153 = vadd.f32 %v2130, %v2149
      %v2154 = vadd.f32 %v2131, %v2149
      %v2155 = vadd.f32 %v2132, %v2149
      %v2156 = vadd.f32 %v2133, %v2149
      %v2157 = vadd.f32 %v2134, %v2149
      %v2158 = vadd.f32 %v2135, %v2149
      %v2159 = vadd.f32 %v2136, %v2149
      %v2160 = vadd.f32 %v2137, %v2149
      %v2161 = vadd.f32 %v2138, %v2149
      %v2162 = vadd.f32 %v2139, %v2149
      %v2163 = vadd.f32 %v2140, %v2149
      %v2164 = vadd.f32 %v2141, %v2149
      %v2165 = vadd.f32 %v2142, %v2149
      %v2166 = vadd.f32 %v2143, %v2149
      %2167 = vst [vmem:[%s406] sm:$0xff] %v2151
      %2168 = vst [vmem:[%s406 + $0x8] sm:$0xff] %v2152
      %2169 = vst [vmem:[%s406 + $0x10] sm:$0xff] %v2153
      %2170 = vst [vmem:[%s406 + $0x18] sm:$0xff] %v2154
      %2171 = vst [vmem:[%s406 + $0x20] sm:$0xff] %v2155
      %2172 = vst [vmem:[%s406 + $0x28] sm:$0xff] %v2156
      %2173 = vst [vmem:[%s406 + $0x30] sm:$0xff] %v2157
      %2174 = vst [vmem:[%s406 + $0x38] sm:$0xff] %v2158
      %2175 = vst [vmem:[%s406 + $0x40] sm:$0xff] %v2159
      %2176 = vst [vmem:[%s406 + $0x48] sm:$0xff] %v2160
      %2177 = vst [vmem:[%s406 + $0x50] sm:$0xff] %v2161
      %2178 = vst [vmem:[%s406 + $0x58] sm:$0xff] %v2162
      %2179 = vst [vmem:[%s406 + $0x60] sm:$0xff] %v2163
      %2180 = vst [vmem:[%s406 + $0x68] sm:$0xff] %v2164
      %2181 = vst [vmem:[%s406 + $0x70] sm:$0xff] %v2165
      %2182 = vst [vmem:[%s406 + $0x78] sm:$0xff] %v2166
      %s2183 = smul.u32 16, %s22
      %p2184 = scmp.lt.s32.totalorder %s21, 1
      %s2185 = scalar_select %p2184, %s21, 1
      %p2186 = scmp.lt.s32.totalorder %s2183, 15
      %s2187 = scalar_select %p2186, %s2183, 15
      %p2188 = scmp.lt.s32.totalorder %s23, 0
      %s2189 = scalar_select %p2188, %s23, 0
      %s2190 = sadd.s32 %s2189, %s2187
      %s2191 = smul.addr %s2185, 16
      %s2192 = sadd.s32 %s2190, %s2191
      %s2193 = smul.addr %s2192, 8
      %s2194 = scalar_lea.vmem %s5, %s2193
      // Predicated region
      $region41: #{_conv_downsample.1} parent=39 // pred_check
        %p2195 = pneg %p195
      $region42: #{_conv_downsample.1} parent=39 // pred_check_branch
        %2197 = sbr.rel (%p2195) target = $region44
      $region43: #{_conv_downsample.1} parent=39 // pred_region
        %s2198 = smul.u32 16, %s22
      $region44: #{_conv_downsample.1} parent=39 // pred_fallthru
        _
    $region40: #{_conv_downsample.1} parent=5 // pred_fallthru
      _
    %p2199 = scmp.le.s32.totalorder 2, %s11
    // Predicated region
    $region45: #{_conv_downsample.1} parent=5 // pred_check
      %p2200 = pneg %p2199
    $region46: #{_conv_downsample.1} parent=5 // pred_check_branch
      %2202 = sbr.rel (%p2200) target = $region48
    $region47: #{_conv_downsample.1} parent=5 // pred_region
      %s2203 = ssub.s32 %s11, 2
      // Predicated region
      $region49: #{_conv_downsample.1} parent=47 // pred_check
        %p2204 = pneg %p201
      $region50: #{_conv_downsample.1} parent=47 // pred_check_branch
        %2206 = sbr.rel (%p2204) target = $region52
      $region51: #{_conv_downsample.1} parent=47 // pred_region
        %s2207 = smul.u32 16, %s25
        %p2208 = scmp.lt.s32.totalorder %s24, 1
        %s2209 = scalar_select %p2208, %s24, 1
        %p2210 = scmp.lt.s32.totalorder %s2207, 15
        %s2211 = scalar_select %p2210, %s2207, 15
        %p2212 = scmp.lt.s32.totalorder %s26, 0
        %s2213 = scalar_select %p2212, %s26, 0
        %s2214 = sadd.s32 %s2213, %s2211
        %s2215 = smul.addr %s2209, 16
        %s2216 = sadd.s32 %s2214, %s2215
        %s2217 = smul.addr %s2216, 8
        %s2218 = scalar_lea.vmem %s5, %s2217
      $region52: #{_conv_downsample.1} parent=47 // pred_fallthru
        _
    $region48: #{_conv_downsample.1} parent=5 // pred_fallthru
      _
  $region6: #{_conv_downsample.1} parent=0 // loop_footer
    %s15 = sadd.s32 1, %s11
  $region7: #{_conv_downsample.1} parent=0 // loop_footer_branch
    %10 = sbr.rel target = $region3
  $region8: #{_conv_downsample.1} parent=0 // loop_exit
    _

</llo_original>
